<compile_context>
chip_gen: v5e
topology: v5e:2x2
jax: 0.10.0
libtpu: 0.0.40
codegen_flags: <defaults>
</compile_context>

<pallas_src>
import jax
import jax.numpy as jnp
from jax.experimental import pallas as pl
from jax.experimental.pallas import tpu as pltpu


C_OUT_PAD = 8  # real c_out = 2*num_classes + 1 = 5, padded to 8 lanes


def _ceil_div(a, b):
    return -(-a // b)


# --------------------------------------------------------------------------
# Pallas kernel: fused {3x3 conv (as 9 K=C_in matmuls) + bias + relu + 1x1
# conv + bias} for a block of CB crops.
# --------------------------------------------------------------------------
def _fused_conv_kernel(x_ref, w1_ref, b1_ref, w2_ref, b2_ref, out_ref):
    # x_ref  : (CB, h+2, w+2, C_in)   halo-padded crops (compute dtype)
    # w1_ref : (9*C_in, 3*C_mid)      stacked 3x3 weights (tr|tcl|geo)
    # b1_ref : (1, 3*C_mid)           f32
    # w2_ref : (3*C_mid, C_OUT_PAD)   block-diagonal 1x1 weights, zero-padded
    # b2_ref : (1, C_OUT_PAD)         f32
    # out_ref: (CB, h*w, C_OUT_PAD)   f32
    cb, hp, wp, cin = x_ref.shape
    h, w = hp - 2, wp - 2
    m = cb * h * w

    # 3x3 conv == sum over the 9 taps of a K=C_in matmul against the matching
    # row-block of W1; the im2col slab is never materialized.  MXU has huge
    # slack at these shapes, so 9 small passes are free relative to HBM.
    hidden = None
    for tap in range(9):
        dh, dw = divmod(tap, 3)
        xs = x_ref[:, dh:dh + h, dw:dw + w, :].reshape(m, cin)
        part = jnp.dot(xs, w1_ref[tap * cin:(tap + 1) * cin, :],
                       preferred_element_type=jnp.float32)
        hidden = part if hidden is None else hidden + part

    hidden = jnp.maximum(hidden + b1_ref[...], 0.0)          # bias + relu in f32
    out = jnp.dot(hidden.astype(w2_ref.dtype), w2_ref[...],
                  preferred_element_type=jnp.float32) + b2_ref[...]
    out_ref[...] = out.reshape(cb, h * w, out_ref.shape[-1]).astype(out_ref.dtype)


# --------------------------------------------------------------------------
# Wrapper: NCHW crops -> (cast, NHWC, halo pad) -> grouped-crop kernel -> NCHW
# --------------------------------------------------------------------------
def textsnake_predictor_pallas(x_crops_nchw, w1, b1, w2p, b2p, c_out, *,
                               target_rows=2048, compute_dtype=jnp.bfloat16):
    """x_crops_nchw: (N, C_in, h, w). Returns (N, c_out, h, w) float32."""
    n, cin, h, w = x_crops_nchw.shape

    # Cast to the compute dtype FIRST so the only HBM slab the kernel reads is
    # already narrow; then NHWC + one-pixel halo pad (no im2col in HBM).
    x = jnp.transpose(x_crops_nchw.astype(compute_dtype), (0, 2, 3, 1))
    x_pad = jnp.pad(x, ((0, 0), (1, 1), (1, 1), (0, 0)))

    # Crops per grid step: fill ~target_rows matmul rows, but keep grid >= 2
    # whenever possible so both v7x TensorCores (megacore) get a share.
    cb = max(1, min(max(1, target_rows // max(1, h * w)), _ceil_div(n, 2), n))
    n_pad = _ceil_div(n, cb) * cb
    if n_pad != n:
        x_pad = jnp.pad(x_pad, ((0, n_pad - n), (0, 0), (0, 0), (0, 0)))

    w1c = w1.astype(compute_dtype)
    w2c = w2p.astype(compute_dtype)

    out3d = pl.pallas_call(
        _fused_conv_kernel,
        out_shape=jax.ShapeDtypeStruct((n_pad, h * w, C_OUT_PAD), jnp.float32),
        grid=(n_pad // cb,),
        in_specs=[
            pl.BlockSpec((cb, h + 2, w + 2, cin), lambda i: (i, 0, 0, 0)),
            pl.BlockSpec(w1c.shape, lambda i: (0, 0)),
            pl.BlockSpec(b1.shape, lambda i: (0, 0)),
            pl.BlockSpec(w2c.shape, lambda i: (0, 0)),
            pl.BlockSpec(b2p.shape, lambda i: (0, 0)),
        ],
        out_specs=pl.BlockSpec((cb, h * w, C_OUT_PAD), lambda i: (i, 0, 0)),
        compiler_params=pltpu.CompilerParams(
            dimension_semantics=("parallel",)),
    )(x_pad, w1c, b1, w2c, b2p)

    # NOTE: rows belonging to padded crops are NOT zero in general
    # (relu(b1) @ W2 + b2) -- the [:n] slice below is load-bearing.
    out = out3d[:n, :, :c_out].reshape(n, h, w, c_out)
    return jnp.transpose(out, (0, 3, 1, 2)).astype(jnp.float32)   # NCHW


# --------------------------------------------------------------------------
# Parameter construction (deterministic kaiming_normal fan_out, zero bias)
# --------------------------------------------------------------------------
def make_params(key, num_inputs, dim_reduced, num_classes):
    keys = jax.random.split(key, 6)

    def kaiming(k, shape):  # shape = (out, in, kh, kw), fan_out mode, relu
        fan_out = shape[0] * shape[2] * shape[3]
        std = (2.0 / fan_out) ** 0.5
        return std * jax.random.normal(k, shape, jnp.float32)

    w_tr3 = kaiming(keys[0], (dim_reduced, num_inputs, 3, 3))
    w_tr1 = kaiming(keys[1], (num_classes, dim_reduced, 1, 1))
    w_tcl3 = kaiming(keys[2], (dim_reduced, num_inputs, 3, 3))
    w_tcl1 = kaiming(keys[3], (num_classes, dim_reduced, 1, 1))
    w_geo3 = kaiming(keys[4], (dim_reduced, num_inputs, 3, 3))
    w_geo1 = kaiming(keys[5], (1, dim_reduced, 1, 1))

    per_branch = dict(tr=(w_tr3, w_tr1), tcl=(w_tcl3, w_tcl1),
                      geo=(w_geo3, w_geo1))

    # Stacked 3x3 weight -> tap-major layout: rows [tap*C_in:(tap+1)*C_in]
    # hold W[:, :, kh, kw] with tap = kh*3 + kw (matches the kernel's shifts).
    def to_k_ci_co(wc):  # (C_mid, C_in, 3, 3) -> (9, C_in, C_mid)
        return jnp.transpose(wc, (2, 3, 1, 0)).reshape(9, wc.shape[1],
                                                       wc.shape[0])

    w1 = jnp.concatenate([to_k_ci_co(w_tr3), to_k_ci_co(w_tcl3),
                          to_k_ci_co(w_geo3)], axis=-1)
    w1 = w1.reshape(9 * num_inputs, 3 * dim_reduced)
    b1 = jnp.zeros((1, 3 * dim_reduced), jnp.float32)

    c_out = 2 * num_classes + 1
    assert c_out <= C_OUT_PAD
    # Block-diagonal 1x1 weights, zero-padded to 8 output columns.
    w2p = jnp.zeros((3 * dim_reduced, C_OUT_PAD), jnp.float32)
    w2p = w2p.at[0:dim_reduced, 0:num_classes].set(
        jnp.transpose(w_tr1[:, :, 0, 0]))
    w2p = w2p.at[dim_reduced:2 * dim_reduced,
                 num_classes:2 * num_classes].set(
        jnp.transpose(w_tcl1[:, :, 0, 0]))
    w2p = w2p.at[2 * dim_reduced:3 * dim_reduced,
                 2 * num_classes:c_out].set(
        jnp.transpose(w_geo1[:, :, 0, 0]))
    b2p = jnp.zeros((1, C_OUT_PAD), jnp.float32)

    return (w1, b1, w2p, b2p), per_branch


# --------------------------------------------------------------------------
# Full forward (mirrors TextsnakeC4Predictor.forward)
# --------------------------------------------------------------------------
def forward(crop_feature_list, features, fused_params, num_classes,
            compute_dtype=jnp.bfloat16):
    batch_size, _, H, W = features[0].shape
    c_out = num_classes * 2 + 1
    dtype = crop_feature_list[0]["feature_map"].dtype
    mask_logits = jnp.zeros((batch_size, c_out, H, W), dtype=dtype)

    # All crops share the same spatial shape -> one pallas_call, crops grouped
    # into the matmul M dimension.
    x_crops = jnp.concatenate(
        [cf["feature_map"] for cf in crop_feature_list], axis=0)
    out = textsnake_predictor_pallas(x_crops, *fused_params, c_out,
                                     compute_dtype=compute_dtype)

    # ONE batched scatter-add over all crops (replaces the per-crop Python
    # .at[].add loop).  The block-diagonal W2 guarantees adding the full
    # 5-channel block is identical to the per-branch adds of the reference.
    idx = jnp.asarray([[cf["batch_idx"], cf["roi"][1], cf["roi"][0]]
                       for cf in crop_feature_list], dtype=jnp.int32)  # (b, ry, rx)
    dnums = jax.lax.ScatterDimensionNumbers(
        update_window_dims=(1, 2, 3),
        inserted_window_dims=(0,),
        scatter_dims_to_operand_dims=(0, 2, 3))
    return jax.lax.scatter_add(mask_logits, idx, out.astype(dtype), dnums,
                               indices_are_sorted=False, unique_indices=False)


# Pure-JAX reference (per-branch convs) to validate the Pallas kernel.
def forward_ref(crop_feature_list, features, per_branch, num_classes):
    dn = ("NCHW", "OIHW", "NCHW")

    def branch(x, w3, w1):
        y = jax.lax.conv_general_dilated(x, w3, (1, 1), ((1, 1), (1, 1)),
                                         dimension_numbers=dn)
        y = jnp.maximum(y, 0.0)
        return jax.lax.conv_general_dilated(y, w1, (1, 1), ((0, 0), (0, 0)),
                                            dimension_numbers=dn)

    batch_size, _, H, W = features[0].shape
    output_channels = num_classes * 2 + 1
    mask_logits = jnp.zeros((batch_size, output_channels, H, W), jnp.float32)
    for cf in crop_feature_list:
        x = cf["feature_map"]
        b = cf["batch_idx"]
        rx, ry, rw, rh = cf["roi"]
        tr = branch(x, *per_branch["tr"])
        tcl = branch(x, *per_branch["tcl"])
        geo = branch(x, *per_branch["geo"])
        mask_logits = mask_logits.at[b:b + 1, 0:2, ry:ry + rh, rx:rx + rw].add(tr)
        mask_logits = mask_logits.at[b:b + 1, 2:4, ry:ry + rh, rx:rx + rw].add(tcl)
        mask_logits = mask_logits.at[b:b + 1, 4:, ry:ry + rh, rx:rx + rw].add(geo)
    return mask_logits


if __name__ == "__main__":
    key = jax.random.PRNGKey(0)

    # Synthetic config: USE_FPN=True -> num_inputs = dim_reduced
    num_classes = 2
    dim_reduced = 16
    num_inputs = 16

    batch_size, H, W = 2, 16, 16
    crop_h = crop_w = 8

    k_feat, k_crop, k_param = jax.random.split(key, 3)
    features = [jax.random.normal(k_feat, (batch_size, num_inputs, H, W),
                                  jnp.float32)]

    crop_keys = jax.random.split(k_crop, 3)
    rois = [(0, 0, crop_w, crop_h), (4, 4, crop_w, crop_h),
            (8, 8, crop_w, crop_h)]
    batch_idxs = [0, 1, 0]
    crop_feature_list = [
        {"feature_map": jax.random.normal(ck, (1, num_inputs, crop_h, crop_w),
                                          jnp.float32),
         "batch_idx": bi, "roi": roi}
        for ck, bi, roi in zip(crop_keys, batch_idxs, rois)
    ]

    fused_params, per_branch = make_params(k_param, num_inputs, dim_reduced,
                                           num_classes)

    ref = jax.block_until_ready(
        forward_ref(crop_feature_list, features, per_branch, num_classes))

    # f32 validation mode: matches the conv reference to 1e-4.
    out_f32 = jax.block_until_ready(
        forward(crop_feature_list, features, fused_params, num_classes,
                compute_dtype=jnp.float32))
    assert out_f32.shape == (batch_size, 2 * num_classes + 1, H, W)
    assert jnp.allclose(out_f32, ref, rtol=1e-4, atol=1e-4), \
        "f32 mismatch vs reference"

    # bf16 production mode (default): halves HBM read traffic, f32 accumulate;
    # validated with a bf16-appropriate tolerance so CI doesn't pin f32.
    out_bf16 = jax.block_until_ready(
        forward(crop_feature_list, features, fused_params, num_classes))
    assert jnp.allclose(out_bf16, ref, rtol=5e-2, atol=1e-1), \
        "bf16 mismatch vs reference"

    print("KERNEL_OK")
</pallas_src>

<mosaic_0001>
module attributes {stable_mosaic.version = 11 : i64} {
  func.func @_fused_conv_kernel(%arg0: i32, %arg1: memref<2x10x10x16xf32, #tpu.memory_space<vmem>>, %arg2: memref<144x48xf32, #tpu.memory_space<vmem>>, %arg3: memref<1x48xf32, #tpu.memory_space<vmem>>, %arg4: memref<48x8xf32, #tpu.memory_space<vmem>>, %arg5: memref<1x8xf32, #tpu.memory_space<vmem>>, %arg6: memref<2x64x8xf32, #tpu.memory_space<vmem>>) attributes {dimension_semantics = [#tpu.dimension_semantics<parallel>], iteration_bounds = array<i64: 2>, scalar_prefetch = 0 : i64, scratch_operands = 0 : i64, tpu.core_type = #tpu.core_type<tc>, window_params = [{transform_indices = @transform_0, window_bounds = array<i64: 2, 10, 10, 16>}, {pipeline_mode = #tpu.pipeline_mode<synchronous>, transform_indices = @transform_1, window_bounds = array<i64: 144, 48>}, {pipeline_mode = #tpu.pipeline_mode<synchronous>, transform_indices = @transform_2, window_bounds = array<i64: 1, 48>}, {pipeline_mode = #tpu.pipeline_mode<synchronous>, transform_indices = @transform_3, window_bounds = array<i64: 48, 8>}, {pipeline_mode = #tpu.pipeline_mode<synchronous>, transform_indices = @transform_4, window_bounds = array<i64: 1, 8>}, {transform_indices = @transform_5, window_bounds = array<i64: 2, 64, 8>}]} {
    %c0 = arith.constant 0 : index
    %c0_0 = arith.constant 0 : index
    %c0_1 = arith.constant 0 : index
    %c0_2 = arith.constant 0 : index
    %0 = vector.load %arg1[%c0, %c0_0, %c0_1, %c0_2] : memref<2x10x10x16xf32, #tpu.memory_space<vmem>>, vector<2x8x8x16xf32>
    %1 = vector.shape_cast %0 : vector<2x8x8x16xf32> to vector<128x16xf32>
    %c0_3 = arith.constant 0 : index
    %c0_4 = arith.constant 0 : index
    %2 = vector.load %arg2[%c0_3, %c0_4] : memref<144x48xf32, #tpu.memory_space<vmem>>, vector<16x48xf32>
    %cst = arith.constant dense<0.000000e+00> : vector<128x48xf32>
    %3 = tpu.matmul %1, %2, %cst {dimension_numbers = #tpu.dot_dimension_numbers<[1], [0], [0], [1], [0, 0, 1, 1], [], []>} : vector<128x16xf32>, vector<16x48xf32>, vector<128x48xf32> -> vector<128x48xf32>
    %c0_5 = arith.constant 0 : index
    %c0_6 = arith.constant 0 : index
    %c1 = arith.constant 1 : index
    %c0_7 = arith.constant 0 : index
    %4 = vector.load %arg1[%c0_5, %c0_6, %c1, %c0_7] : memref<2x10x10x16xf32, #tpu.memory_space<vmem>>, vector<2x8x8x16xf32>
    %5 = vector.shape_cast %4 : vector<2x8x8x16xf32> to vector<128x16xf32>
    %c16 = arith.constant 16 : index
    %c0_8 = arith.constant 0 : index
    %6 = vector.load %arg2[%c16, %c0_8] : memref<144x48xf32, #tpu.memory_space<vmem>>, vector<16x48xf32>
    %cst_9 = arith.constant dense<0.000000e+00> : vector<128x48xf32>
    %7 = tpu.matmul %5, %6, %cst_9 {dimension_numbers = #tpu.dot_dimension_numbers<[1], [0], [0], [1], [0, 0, 1, 1], [], []>} : vector<128x16xf32>, vector<16x48xf32>, vector<128x48xf32> -> vector<128x48xf32>
    %8 = arith.addf %3, %7 : vector<128x48xf32>
    %c0_10 = arith.constant 0 : index
    %c0_11 = arith.constant 0 : index
    %c2 = arith.constant 2 : index
    %c0_12 = arith.constant 0 : index
    %9 = vector.load %arg1[%c0_10, %c0_11, %c2, %c0_12] : memref<2x10x10x16xf32, #tpu.memory_space<vmem>>, vector<2x8x8x16xf32>
    %10 = vector.shape_cast %9 : vector<2x8x8x16xf32> to vector<128x16xf32>
    %c32 = arith.constant 32 : index
    %c0_13 = arith.constant 0 : index
    %11 = vector.load %arg2[%c32, %c0_13] : memref<144x48xf32, #tpu.memory_space<vmem>>, vector<16x48xf32>
    %cst_14 = arith.constant dense<0.000000e+00> : vector<128x48xf32>
    %12 = tpu.matmul %10, %11, %cst_14 {dimension_numbers = #tpu.dot_dimension_numbers<[1], [0], [0], [1], [0, 0, 1, 1], [], []>} : vector<128x16xf32>, vector<16x48xf32>, vector<128x48xf32> -> vector<128x48xf32>
    %13 = arith.addf %8, %12 : vector<128x48xf32>
    %c0_15 = arith.constant 0 : index
    %c1_16 = arith.constant 1 : index
    %c0_17 = arith.constant 0 : index
    %c0_18 = arith.constant 0 : index
    %14 = vector.load %arg1[%c0_15, %c1_16, %c0_17, %c0_18] : memref<2x10x10x16xf32, #tpu.memory_space<vmem>>, vector<2x8x8x16xf32>
    %15 = vector.shape_cast %14 : vector<2x8x8x16xf32> to vector<128x16xf32>
    %c48 = arith.constant 48 : index
    %c0_19 = arith.constant 0 : index
    %16 = vector.load %arg2[%c48, %c0_19] : memref<144x48xf32, #tpu.memory_space<vmem>>, vector<16x48xf32>
    %cst_20 = arith.constant dense<0.000000e+00> : vector<128x48xf32>
    %17 = tpu.matmul %15, %16, %cst_20 {dimension_numbers = #tpu.dot_dimension_numbers<[1], [0], [0], [1], [0, 0, 1, 1], [], []>} : vector<128x16xf32>, vector<16x48xf32>, vector<128x48xf32> -> vector<128x48xf32>
    %18 = arith.addf %13, %17 : vector<128x48xf32>
    %c0_21 = arith.constant 0 : index
    %c1_22 = arith.constant 1 : index
    %c1_23 = arith.constant 1 : index
    %c0_24 = arith.constant 0 : index
    %19 = vector.load %arg1[%c0_21, %c1_22, %c1_23, %c0_24] : memref<2x10x10x16xf32, #tpu.memory_space<vmem>>, vector<2x8x8x16xf32>
    %20 = vector.shape_cast %19 : vector<2x8x8x16xf32> to vector<128x16xf32>
    %c64 = arith.constant 64 : index
    %c0_25 = arith.constant 0 : index
    %21 = vector.load %arg2[%c64, %c0_25] : memref<144x48xf32, #tpu.memory_space<vmem>>, vector<16x48xf32>
    %cst_26 = arith.constant dense<0.000000e+00> : vector<128x48xf32>
    %22 = tpu.matmul %20, %21, %cst_26 {dimension_numbers = #tpu.dot_dimension_numbers<[1], [0], [0], [1], [0, 0, 1, 1], [], []>} : vector<128x16xf32>, vector<16x48xf32>, vector<128x48xf32> -> vector<128x48xf32>
    %23 = arith.addf %18, %22 : vector<128x48xf32>
    %c0_27 = arith.constant 0 : index
    %c1_28 = arith.constant 1 : index
    %c2_29 = arith.constant 2 : index
    %c0_30 = arith.constant 0 : index
    %24 = vector.load %arg1[%c0_27, %c1_28, %c2_29, %c0_30] : memref<2x10x10x16xf32, #tpu.memory_space<vmem>>, vector<2x8x8x16xf32>
    %25 = vector.shape_cast %24 : vector<2x8x8x16xf32> to vector<128x16xf32>
    %c80 = arith.constant 80 : index
    %c0_31 = arith.constant 0 : index
    %26 = vector.load %arg2[%c80, %c0_31] : memref<144x48xf32, #tpu.memory_space<vmem>>, vector<16x48xf32>
    %cst_32 = arith.constant dense<0.000000e+00> : vector<128x48xf32>
    %27 = tpu.matmul %25, %26, %cst_32 {dimension_numbers = #tpu.dot_dimension_numbers<[1], [0], [0], [1], [0, 0, 1, 1], [], []>} : vector<128x16xf32>, vector<16x48xf32>, vector<128x48xf32> -> vector<128x48xf32>
    %28 = arith.addf %23, %27 : vector<128x48xf32>
    %c0_33 = arith.constant 0 : index
    %c2_34 = arith.constant 2 : index
    %c0_35 = arith.constant 0 : index
    %c0_36 = arith.constant 0 : index
    %29 = vector.load %arg1[%c0_33, %c2_34, %c0_35, %c0_36] : memref<2x10x10x16xf32, #tpu.memory_space<vmem>>, vector<2x8x8x16xf32>
    %30 = vector.shape_cast %29 : vector<2x8x8x16xf32> to vector<128x16xf32>
    %c96 = arith.constant 96 : index
    %c0_37 = arith.constant 0 : index
    %31 = vector.load %arg2[%c96, %c0_37] : memref<144x48xf32, #tpu.memory_space<vmem>>, vector<16x48xf32>
    %cst_38 = arith.constant dense<0.000000e+00> : vector<128x48xf32>
    %32 = tpu.matmul %30, %31, %cst_38 {dimension_numbers = #tpu.dot_dimension_numbers<[1], [0], [0], [1], [0, 0, 1, 1], [], []>} : vector<128x16xf32>, vector<16x48xf32>, vector<128x48xf32> -> vector<128x48xf32>
    %33 = arith.addf %28, %32 : vector<128x48xf32>
    %c0_39 = arith.constant 0 : index
    %c2_40 = arith.constant 2 : index
    %c1_41 = arith.constant 1 : index
    %c0_42 = arith.constant 0 : index
    %34 = vector.load %arg1[%c0_39, %c2_40, %c1_41, %c0_42] : memref<2x10x10x16xf32, #tpu.memory_space<vmem>>, vector<2x8x8x16xf32>
    %35 = vector.shape_cast %34 : vector<2x8x8x16xf32> to vector<128x16xf32>
    %c112 = arith.constant 112 : index
    %c0_43 = arith.constant 0 : index
    %36 = vector.load %arg2[%c112, %c0_43] : memref<144x48xf32, #tpu.memory_space<vmem>>, vector<16x48xf32>
    %cst_44 = arith.constant dense<0.000000e+00> : vector<128x48xf32>
    %37 = tpu.matmul %35, %36, %cst_44 {dimension_numbers = #tpu.dot_dimension_numbers<[1], [0], [0], [1], [0, 0, 1, 1], [], []>} : vector<128x16xf32>, vector<16x48xf32>, vector<128x48xf32> -> vector<128x48xf32>
    %38 = arith.addf %33, %37 : vector<128x48xf32>
    %c0_45 = arith.constant 0 : index
    %c2_46 = arith.constant 2 : index
    %c2_47 = arith.constant 2 : index
    %c0_48 = arith.constant 0 : index
    %39 = vector.load %arg1[%c0_45, %c2_46, %c2_47, %c0_48] : memref<2x10x10x16xf32, #tpu.memory_space<vmem>>, vector<2x8x8x16xf32>
    %40 = vector.shape_cast %39 : vector<2x8x8x16xf32> to vector<128x16xf32>
    %c128 = arith.constant 128 : index
    %c0_49 = arith.constant 0 : index
    %41 = vector.load %arg2[%c128, %c0_49] : memref<144x48xf32, #tpu.memory_space<vmem>>, vector<16x48xf32>
    %cst_50 = arith.constant dense<0.000000e+00> : vector<128x48xf32>
    %42 = tpu.matmul %40, %41, %cst_50 {dimension_numbers = #tpu.dot_dimension_numbers<[1], [0], [0], [1], [0, 0, 1, 1], [], []>} : vector<128x16xf32>, vector<16x48xf32>, vector<128x48xf32> -> vector<128x48xf32>
    %43 = arith.addf %38, %42 : vector<128x48xf32>
    %c0_51 = arith.constant 0 : index
    %c0_52 = arith.constant 0 : index
    %44 = vector.load %arg3[%c0_51, %c0_52] : memref<1x48xf32, #tpu.memory_space<vmem>>, vector<1x48xf32>
    %45 = vector.broadcast %44 : vector<1x48xf32> to vector<128x48xf32>
    %46 = arith.addf %43, %45 : vector<128x48xf32>
    %cst_53 = arith.constant 0.000000e+00 : f32
    %47 = vector.broadcast %cst_53 : f32 to vector<128x48xf32>
    %48 = arith.maximumf %46, %47 : vector<128x48xf32>
    %c0_54 = arith.constant 0 : index
    %c0_55 = arith.constant 0 : index
    %49 = vector.load %arg4[%c0_54, %c0_55] : memref<48x8xf32, #tpu.memory_space<vmem>>, vector<48x8xf32>
    %cst_56 = arith.constant dense<0.000000e+00> : vector<128x8xf32>
    %50 = tpu.matmul %48, %49, %cst_56 {dimension_numbers = #tpu.dot_dimension_numbers<[1], [0], [0], [1], [0, 0, 1, 1], [], []>} : vector<128x48xf32>, vector<48x8xf32>, vector<128x8xf32> -> vector<128x8xf32>
    %c0_57 = arith.constant 0 : index
    %c0_58 = arith.constant 0 : index
    %51 = vector.load %arg5[%c0_57, %c0_58] : memref<1x8xf32, #tpu.memory_space<vmem>>, vector<1x8xf32>
    %52 = vector.broadcast %51 : vector<1x8xf32> to vector<128x8xf32>
    %53 = arith.addf %50, %52 : vector<128x8xf32>
    %54 = vector.shape_cast %53 : vector<128x8xf32> to vector<2x64x8xf32>
    %c0_59 = arith.constant 0 : index
    %c0_60 = arith.constant 0 : index
    %c0_61 = arith.constant 0 : index
    %55 = vector.load %arg6[%c0_59, %c0_60, %c0_61] : memref<2x64x8xf32, #tpu.memory_space<vmem>>, vector<2x64x8xf32>
    tpu.vector_store %arg6[%c0_59, %c0_60, %c0_61], %54 {strides = array<i32>} : memref<2x64x8xf32, #tpu.memory_space<vmem>>, vector<2x64x8xf32>,
    return
  }
  func.func @transform_0(%arg0: i32) -> (i32, i32, i32, i32) {
    %c0_i32 = arith.constant 0 : i32
    %c0_i32_0 = arith.constant 0 : i32
    %c0_i32_1 = arith.constant 0 : i32
    %c0_i32_2 = arith.constant 0 : i32
    return %arg0, %c0_i32, %c0_i32_0, %c0_i32_1 : i32, i32, i32, i32
  }
  func.func @transform_1(%arg0: i32) -> (i32, i32) {
    %c0_i32 = arith.constant 0 : i32
    %c0_i32_0 = arith.constant 0 : i32
    %c0_i32_1 = arith.constant 0 : i32
    return %c0_i32, %c0_i32_0 : i32, i32
  }
  func.func @transform_2(%arg0: i32) -> (i32, i32) {
    %c0_i32 = arith.constant 0 : i32
    %c0_i32_0 = arith.constant 0 : i32
    %c0_i32_1 = arith.constant 0 : i32
    return %c0_i32, %c0_i32_0 : i32, i32
  }
  func.func @transform_3(%arg0: i32) -> (i32, i32) {
    %c0_i32 = arith.constant 0 : i32
    %c0_i32_0 = arith.constant 0 : i32
    %c0_i32_1 = arith.constant 0 : i32
    return %c0_i32, %c0_i32_0 : i32, i32
  }
  func.func @transform_4(%arg0: i32) -> (i32, i32) {
    %c0_i32 = arith.constant 0 : i32
    %c0_i32_0 = arith.constant 0 : i32
    %c0_i32_1 = arith.constant 0 : i32
    return %c0_i32, %c0_i32_0 : i32, i32
  }
  func.func @transform_5(%arg0: i32) -> (i32, i32, i32) {
    %c0_i32 = arith.constant 0 : i32
    %c0_i32_0 = arith.constant 0 : i32
    %c0_i32_1 = arith.constant 0 : i32
    return %arg0, %c0_i32, %c0_i32_0 : i32, i32, i32
  }
}

</mosaic_0001>

<llo_original>
// kernel: tpu_custom_call.1
$region0: #{tpu_custom_call.1}
  #allocation0 [shape = 'u32[]', space=smem, size = 0x4, offset = 0x4, fixed_abs, tag = 'smem constant byte address 0x4 - core index']
  #allocation1 [shape = 'u32[72,128]{1,0:T(1,128)}', space=vmem, size = 0x9000, scoped, tag = 'internal scratch']
  %s0 = inlined_call_operand.vmem [shape: f32[4,10,10,16], index: 0, kind: input, shape index: {}]
  %s1 = inlined_call_operand.vmem [shape: f32[144,48], index: 1, kind: input, shape index: {}]
  %s2 = inlined_call_operand.vmem [shape: f32[1,48], index: 2, kind: input, shape index: {}]
  %s3 = inlined_call_operand.vmem [shape: f32[48,8], index: 3, kind: input, shape index: {}]
  %s4 = inlined_call_operand.vmem [shape: f32[1,8], index: 4, kind: input, shape index: {}]
  %s5 = inlined_call_operand.vmem [shape: f32[4,64,8], index: 5, kind: output, shape index: {}]
  %s6 = sld [smem:[#allocation0]]
  $region53: #{tpu_custom_call.1} parent=0
    _
  %s8 = ssub.s32 1, %s6
  %s9 = scalar_select 0, %s8, %s6
  loop: start=0, step=1, limit=4
  $region2: #{tpu_custom_call.1} parent=0 // loop_pre_header
    _
  $region3: #{tpu_custom_call.1} parent=0 // loop_header
    %s11 = sphi 0, %s15
    %p12 = scmp.ge.s32.totalorder %s11, 4
    %s21 = sphi 0, %s23
    %s24 = sphi 0, %s21
    %s25 = sphi 0, %s24
    %s41 = sphi 0, %s25
    %s45 = sphi 0, %s45
    %s47 = sphi 0, %s45
    %s48 = sphi 0, %s47
    %s62 = sphi 0, %s48
    %s66 = sphi 0, %s66
    %s68 = sphi 0, %s66
    %s69 = sphi 0, %s68
    %s83 = sphi 0, %s69
    %s87 = sphi 0, %s87
    %s89 = sphi 0, %s87
    %s90 = sphi 0, %s89
    %s104 = sphi 0, %s90
    %s108 = sphi 0, %s108
    %s110 = sphi 0, %s108
    %s111 = sphi 0, %s110
    %s125 = sphi 0, %s111
    %s131 = sphi 0, %s133
    %s134 = sphi 0, %s131
    %s135 = sphi 0, %s134
    %s151 = sphi 0, %s135
  $region4: #{tpu_custom_call.1} parent=0 // loop_header_branch
    %14 = sbr.rel (%p12) target = $region8
  $region5: #{tpu_custom_call.1} parent=0 // loop_body
    %s16 = ssub.s32 %s11, 1
    %s17 = ssub.s32 %s11, 2
    %s18 = sadd.s32 %s11, 1
    %s19 = ssub.s32 %s11, %s18
    %p20 = scmp.eq.s32.totalorder %s19, 0
    %s22 = sadd.s32 %s21, 1
    %s23 = scalar_select %p20, %s21, %s22
    %p26 = pneg %p20
    %p27 = scmp.eq.s32.totalorder %s11, 1
    %p28 = por %p26, %p27
    %p29 = scmp.ne.s32.totalorder %s21, %s24
    %p30 = scmp.eq.s32.totalorder %s11, 0
    %p31 = por %p29, %p30
    %p32 = scmp.ne.s32.totalorder %s21, %s24
    %p33 = scmp.eq.s32.totalorder %s16, 1
    %p34 = por %p32, %p33
    %p35 = scmp.ne.s32.totalorder %s24, %s25
    %p36 = scmp.eq.s32.totalorder %s16, 0
    %p37 = por %p35, %p36
    %p38 = scmp.ne.s32.totalorder %s24, %s25
    %p39 = scmp.eq.s32.totalorder %s17, 1
    %p40 = por %p38, %p39
    %p42 = scmp.ne.s32.totalorder %s25, %s41
    %p43 = scmp.eq.s32.totalorder %s17, 0
    %p44 = por %p42, %p43
    %s46 = sadd.s32 %s45, 1
    %p49 = scmp.eq.s32.totalorder %s11, 1
    %p50 = scmp.ne.s32.totalorder %s45, %s47
    %p51 = scmp.eq.s32.totalorder %s11, 0
    %p52 = por %p50, %p51
    %p53 = scmp.ne.s32.totalorder %s45, %s47
    %p54 = scmp.eq.s32.totalorder %s16, 1
    %p55 = por %p53, %p54
    %p56 = scmp.ne.s32.totalorder %s47, %s48
    %p57 = scmp.eq.s32.totalorder %s16, 0
    %p58 = por %p56, %p57
    %p59 = scmp.ne.s32.totalorder %s47, %s48
    %p60 = scmp.eq.s32.totalorder %s17, 1
    %p61 = por %p59, %p60
    %p63 = scmp.ne.s32.totalorder %s48, %s62
    %p64 = scmp.eq.s32.totalorder %s17, 0
    %p65 = por %p63, %p64
    %s67 = sadd.s32 %s66, 1
    %p70 = scmp.eq.s32.totalorder %s11, 1
    %p71 = scmp.ne.s32.totalorder %s66, %s68
    %p72 = scmp.eq.s32.totalorder %s11, 0
    %p73 = por %p71, %p72
    %p74 = scmp.ne.s32.totalorder %s66, %s68
    %p75 = scmp.eq.s32.totalorder %s16, 1
    %p76 = por %p74, %p75
    %p77 = scmp.ne.s32.totalorder %s68, %s69
    %p78 = scmp.eq.s32.totalorder %s16, 0
    %p79 = por %p77, %p78
    %p80 = scmp.ne.s32.totalorder %s68, %s69
    %p81 = scmp.eq.s32.totalorder %s17, 1
    %p82 = por %p80, %p81
    %p84 = scmp.ne.s32.totalorder %s69, %s83
    %p85 = scmp.eq.s32.totalorder %s17, 0
    %p86 = por %p84, %p85
    %s88 = sadd.s32 %s87, 1
    %p91 = scmp.eq.s32.totalorder %s11, 1
    %p92 = scmp.ne.s32.totalorder %s87, %s89
    %p93 = scmp.eq.s32.totalorder %s11, 0
    %p94 = por %p92, %p93
    %p95 = scmp.ne.s32.totalorder %s87, %s89
    %p96 = scmp.eq.s32.totalorder %s16, 1
    %p97 = por %p95, %p96
    %p98 = scmp.ne.s32.totalorder %s89, %s90
    %p99 = scmp.eq.s32.totalorder %s16, 0
    %p100 = por %p98, %p99
    %p101 = scmp.ne.s32.totalorder %s89, %s90
    %p102 = scmp.eq.s32.totalorder %s17, 1
    %p103 = por %p101, %p102
    %p105 = scmp.ne.s32.totalorder %s90, %s104
    %p106 = scmp.eq.s32.totalorder %s17, 0
    %p107 = por %p105, %p106
    %s109 = sadd.s32 %s108, 1
    %p112 = scmp.eq.s32.totalorder %s11, 1
    %p113 = scmp.ne.s32.totalorder %s108, %s110
    %p114 = scmp.eq.s32.totalorder %s11, 0
    %p115 = por %p113, %p114
    %p116 = scmp.ne.s32.totalorder %s108, %s110
    %p117 = scmp.eq.s32.totalorder %s16, 1
    %p118 = por %p116, %p117
    %p119 = scmp.ne.s32.totalorder %s110, %s111
    %p120 = scmp.eq.s32.totalorder %s16, 0
    %p121 = por %p119, %p120
    %p122 = scmp.ne.s32.totalorder %s110, %s111
    %p123 = scmp.eq.s32.totalorder %s17, 1
    %p124 = por %p122, %p123
    %p126 = scmp.ne.s32.totalorder %s111, %s125
    %p127 = scmp.eq.s32.totalorder %s17, 0
    %p128 = por %p126, %p127
    %s129 = ssub.s32 %s11, %s18
    %p130 = scmp.eq.s32.totalorder %s129, 0
    %s132 = sadd.s32 %s131, 1
    %s133 = scalar_select %p130, %s131, %s132
    %p136 = pneg %p130
    %p137 = scmp.eq.s32.totalorder %s11, 1
    %p138 = por %p136, %p137
    %p139 = scmp.ne.s32.totalorder %s131, %s134
    %p140 = scmp.eq.s32.totalorder %s11, 0
    %p141 = por %p139, %p140
    %p142 = scmp.ne.s32.totalorder %s131, %s134
    %p143 = scmp.eq.s32.totalorder %s16, 1
    %p144 = por %p142, %p143
    %p145 = scmp.ne.s32.totalorder %s134, %s135
    %p146 = scmp.eq.s32.totalorder %s16, 0
    %p147 = por %p145, %p146
    %p148 = scmp.ne.s32.totalorder %s134, %s135
    %p149 = scmp.eq.s32.totalorder %s17, 1
    %p150 = por %p148, %p149
    %p152 = scmp.ne.s32.totalorder %s135, %s151
    %p153 = scmp.eq.s32.totalorder %s17, 0
    %p154 = por %p152, %p153
    %p155 = scmp.le.s32.totalorder 1, %s11
    %p156 = scmp.lt.s32.totalorder %s11, 3
    %p157 = pnand %p155, %p156
    %p158 = pneg %p157
    // Predicated region
    $region9: #{tpu_custom_call.1} parent=5 // pred_check
      _
    $region10: #{tpu_custom_call.1} parent=5 // pred_check_branch
      %160 = sbr.rel (%p157) target = $region12
    $region11: #{tpu_custom_call.1} parent=5 // pred_region
      %s161 = ssub.s32 %s11, 1
      // Predicated region
      $region13: #{tpu_custom_call.1} parent=11 // pred_check
        %p162 = pneg %p58
      $region14: #{tpu_custom_call.1} parent=11 // pred_check_branch
        %164 = sbr.rel (%p162) target = $region16
      $region15: #{tpu_custom_call.1} parent=11 // pred_region
        _
      $region16: #{tpu_custom_call.1} parent=11 // pred_fallthru
        _
      // Predicated region
      $region17: #{tpu_custom_call.1} parent=11 // pred_check
        %p165 = pneg %p79
      $region18: #{tpu_custom_call.1} parent=11 // pred_check_branch
        %167 = sbr.rel (%p165) target = $region20
      $region19: #{tpu_custom_call.1} parent=11 // pred_region
        _
      $region20: #{tpu_custom_call.1} parent=11 // pred_fallthru
        _
      // Predicated region
      $region21: #{tpu_custom_call.1} parent=11 // pred_check
        %p168 = pneg %p100
      $region22: #{tpu_custom_call.1} parent=11 // pred_check_branch
        %170 = sbr.rel (%p168) target = $region24
      $region23: #{tpu_custom_call.1} parent=11 // pred_region
        _
      $region24: #{tpu_custom_call.1} parent=11 // pred_fallthru
        _
      // Predicated region
      $region25: #{tpu_custom_call.1} parent=11 // pred_check
        %p171 = pneg %p121
      $region26: #{tpu_custom_call.1} parent=11 // pred_check_branch
        %173 = sbr.rel (%p171) target = $region28
      $region27: #{tpu_custom_call.1} parent=11 // pred_region
        _
      $region28: #{tpu_custom_call.1} parent=11 // pred_fallthru
        _
    $region12: #{tpu_custom_call.1} parent=5 // pred_fallthru
      _
    %p174 = scmp.lt.s32.totalorder %s11, 2
    // Predicated region
    $region29: #{tpu_custom_call.1} parent=5 // pred_check
      %p175 = pneg %p174
    $region30: #{tpu_custom_call.1} parent=5 // pred_check_branch
      %177 = sbr.rel (%p175) target = $region32
    $region31: #{tpu_custom_call.1} parent=5 // pred_region
      // Predicated region
      $region33: #{tpu_custom_call.1} parent=31 // pred_check
        %p178 = pneg %p31
      $region34: #{tpu_custom_call.1} parent=31 // pred_check_branch
        %180 = sbr.rel (%p178) target = $region36
      $region35: #{tpu_custom_call.1} parent=31 // pred_region
        %s181 = smul.u32 2, %s11
        %p182 = scmp.lt.s32.totalorder %s181, 3
        %s183 = scalar_select %p182, %s181, 3
        %s184 = smul.addr %s183, 20
        %s185 = smul.addr %s184, 8
        %s186 = scalar_lea.vmem %s0, %s185
        %s187 = smul.u32 2, %s11
      $region36: #{tpu_custom_call.1} parent=31 // pred_fallthru
        _
    $region32: #{tpu_custom_call.1} parent=5 // pred_fallthru
      _
    %p188 = scmp.le.s32.totalorder 1, %s11
    %p189 = scmp.lt.s32.totalorder %s11, 3
    %p190 = pnand %p188, %p189
    %p191 = pneg %p190
    // Predicated region
    $region37: #{tpu_custom_call.1} parent=5 // pred_check
      _
    $region38: #{tpu_custom_call.1} parent=5 // pred_check_branch
      %193 = sbr.rel (%p190) target = $region40
    $region39: #{tpu_custom_call.1} parent=5 // pred_region
      %s194 = ssub.s32 %s11, 1
      %s195 = smul.u32 2, %s16
      %p196 = scmp.lt.s32.totalorder %s195, 3
      %s197 = scalar_select %p196, %s195, 3
      %s198 = smul.addr %s197, 20
      %s199 = smul.addr %s198, 8
      %s200 = scalar_lea.vmem %s0, %s199
      %p201 = pneg %p37
      %p202 = pneg %p34
      %p203 = pneg %p58
      %p204 = pneg %p55
      %p205 = pneg %p79
      %p206 = pneg %p76
      %p207 = pneg %p100
      %p208 = pneg %p97
      %p209 = pneg %p121
      %p210 = pneg %p118
      %p211 = pneg %p147
      %p212 = pneg %p144
      %s213 = smul.u32 2, %s16
      %p214 = scmp.lt.s32.totalorder %s213, 3
      %s215 = scalar_select %p214, %s213, 3
      %s216 = smul.addr %s215, 8
      %s217 = smul.addr %s216, 8
      %s218 = scalar_lea.vmem %s5, %s217
      %s219 = smul.u32 2, %s16
      %p220 = scmp.lt.s32.totalorder %s219, 3
      %s221 = scalar_select %p220, %s219, 3
      %s222 = smul.addr %s221, 20
      %s223 = smul.addr %s222, 8
      %s224 = scalar_lea.vmem %s0, %s223
      %s225 = smul.u32 2, %s16
      %s226 = smul.u32 2, %s16
      %p227 = scmp.lt.s32.totalorder %s226, 3
      %s228 = scalar_select %p227, %s226, 3
      %s229 = smul.addr %s228, 8
      %s230 = smul.addr %s229, 8
      %s231 = scalar_lea.vmem %s5, %s230
      %s232 = smul.u32 2, %s16
      %v233 = vld [vmem:[%s224] sm:$0xff]
      %v234 = vld [vmem:[%s224 + $0x10] sm:$0xff]
      %v235 = vld [vmem:[%s224 + $0x20] sm:$0xff]
      %v236 = vld [vmem:[%s224 + $0x30] sm:$0xff]
      %v237 = vld [vmem:[%s224 + $0x40] sm:$0xff]
      %v238 = vld [vmem:[%s224 + $0x50] sm:$0xff]
      %v239 = vld [vmem:[%s224 + $0x60] sm:$0xff]
      %v240 = vld [vmem:[%s224 + $0x70] sm:$0xff]
      %v241 = vld [vmem:[%s224 + $0xa0] sm:$0xff]
      %v242 = vld [vmem:[%s224 + $0xb0] sm:$0xff]
      %v243 = vld [vmem:[%s224 + $0xc0] sm:$0xff]
      %v244 = vld [vmem:[%s224 + $0xd0] sm:$0xff]
      %v245 = vld [vmem:[%s224 + $0xe0] sm:$0xff]
      %v246 = vld [vmem:[%s224 + $0xf0] sm:$0xff]
      %v247 = vld [vmem:[%s224 + $0x100] sm:$0xff]
      %v248 = vld [vmem:[%s224 + $0x110] sm:$0xff]
      %v249 = vld [vmem:[%s1] sm:$0xff]
      %v250 = vld [vmem:[%s1 + $0x8] sm:$0xff]
      %v251 = vld [vmem:[%s224 + $0x1] sm:$0xff]
      %v252 = vld [vmem:[%s224 + $0x11] sm:$0xff]
      %v253 = vld [vmem:[%s224 + $0x21] sm:$0xff]
      %v254 = vld [vmem:[%s224 + $0x31] sm:$0xff]
      %v255 = vld [vmem:[%s224 + $0x41] sm:$0xff]
      %v256 = vld [vmem:[%s224 + $0x51] sm:$0xff]
      %v257 = vld [vmem:[%s224 + $0x61] sm:$0xff]
      %v258 = vld [vmem:[%s224 + $0x71] sm:$0xff]
      %v259 = vld [vmem:[%s224 + $0xa1] sm:$0xff]
      %v260 = vld [vmem:[%s224 + $0xb1] sm:$0xff]
      %v261 = vld [vmem:[%s224 + $0xc1] sm:$0xff]
      %v262 = vld [vmem:[%s224 + $0xd1] sm:$0xff]
      %v263 = vld [vmem:[%s224 + $0xe1] sm:$0xff]
      %v264 = vld [vmem:[%s224 + $0xf1] sm:$0xff]
      %v265 = vld [vmem:[%s224 + $0x101] sm:$0xff]
      %v266 = vld [vmem:[%s224 + $0x111] sm:$0xff]
      %v267 = vld [vmem:[%s1 + $0x10] sm:$0xff]
      %v268 = vld [vmem:[%s1 + $0x18] sm:$0xff]
      %vm269 = vcmask 130048
      %v271 = vsel %vm269, %v251, 0
      %v274 = vsel %vm269, %v252, 0
      %v277 = vsel %vm269, %v253, 0
      %v280 = vsel %vm269, %v254, 0
      %v283 = vsel %vm269, %v255, 0
      %v286 = vsel %vm269, %v256, 0
      %v289 = vsel %vm269, %v257, 0
      %v292 = vsel %vm269, %v258, 0
      %v295 = vsel %vm269, %v259, 0
      %v298 = vsel %vm269, %v260, 0
      %v301 = vsel %vm269, %v261, 0
      %v304 = vsel %vm269, %v262, 0
      %v307 = vsel %vm269, %v263, 0
      %v310 = vsel %vm269, %v264, 0
      %v313 = vsel %vm269, %v265, 0
      %v316 = vsel %vm269, %v266, 0
      %318 = vmatpush.msra.mxu0 0.0
      %319 = vmatpush.msra.mxu0 0.0
      %320 = vmatpush.msra.mxu0 0.0
      %321 = vmatpush.msra.mxu0 0.0
      %322 = vmatpush.msra.mxu0 0.0
      %323 = vmatpush.msra.mxu0 0.0
      %324 = vmatpush.msra.mxu0 0.0
      %325 = vmatpush.msra.mxu0 0.0
      %326 = vmatpush.msra.mxu0 0.0
      %327 = vmatpush.msra.mxu0 0.0
      %328 = vmatpush.msra.mxu0 0.0
      %329 = vmatpush.msra.mxu0 0.0
      %330 = vmatpush.msra.mxu0 0.0
      %331 = vmatpush.msra.mxu0 0.0
      %332 = vmatpush.msra.mxu0 %v268
      %333 = vmatpush.msra.mxu0 %v267
      %334 = vmatmul.f32.gmra.mxu0 %v271
      %v335 = vpop.f32.mrf.mxu0
      %v336 = vadd.f32 0.0, %v335
      %337 = vmatmul.f32.gmra.mxu0 %v274
      %v338 = vpop.f32.mrf.mxu0
      %v339 = vadd.f32 0.0, %v338
      %340 = vmatmul.f32.gmra.mxu0 %v277
      %v341 = vpop.f32.mrf.mxu0
      %v342 = vadd.f32 0.0, %v341
      %343 = vmatmul.f32.gmra.mxu0 %v280
      %v344 = vpop.f32.mrf.mxu0
      %v345 = vadd.f32 0.0, %v344
      %346 = vmatmul.f32.gmra.mxu0 %v283
      %v347 = vpop.f32.mrf.mxu0
      %v348 = vadd.f32 0.0, %v347
      %349 = vmatmul.f32.gmra.mxu0 %v286
      %v350 = vpop.f32.mrf.mxu0
      %v351 = vadd.f32 0.0, %v350
      %352 = vmatmul.f32.gmra.mxu0 %v289
      %v353 = vpop.f32.mrf.mxu0
      %v354 = vadd.f32 0.0, %v353
      %355 = vmatmul.f32.gmra.mxu0 %v292
      %v356 = vpop.f32.mrf.mxu0
      %v357 = vadd.f32 0.0, %v356
      %358 = vmatmul.f32.gmra.mxu0 %v295
      %v359 = vpop.f32.mrf.mxu0
      %v360 = vadd.f32 0.0, %v359
      %361 = vmatmul.f32.gmra.mxu0 %v298
      %v362 = vpop.f32.mrf.mxu0
      %v363 = vadd.f32 0.0, %v362
      %364 = vmatmul.f32.gmra.mxu0 %v301
      %v365 = vpop.f32.mrf.mxu0
      %v366 = vadd.f32 0.0, %v365
      %367 = vmatmul.f32.gmra.mxu0 %v304
      %v368 = vpop.f32.mrf.mxu0
      %v369 = vadd.f32 0.0, %v368
      %370 = vmatmul.f32.gmra.mxu0 %v307
      %v371 = vpop.f32.mrf.mxu0
      %v372 = vadd.f32 0.0, %v371
      %373 = vmatmul.f32.gmra.mxu0 %v310
      %v374 = vpop.f32.mrf.mxu0
      %v375 = vadd.f32 0.0, %v374
      %376 = vmatmul.f32.gmra.mxu0 %v313
      %v377 = vpop.f32.mrf.mxu0
      %v378 = vadd.f32 0.0, %v377
      %379 = vmatmul.f32.gmra.mxu0 %v316
      %v380 = vpop.f32.mrf.mxu0
      %v381 = vadd.f32 0.0, %v380
      %382 = vdwg.mxu0
      %v384 = vsel %vm269, %v233, 0
      %v387 = vsel %vm269, %v234, 0
      %v390 = vsel %vm269, %v235, 0
      %v393 = vsel %vm269, %v236, 0
      %v396 = vsel %vm269, %v237, 0
      %v399 = vsel %vm269, %v238, 0
      %v402 = vsel %vm269, %v239, 0
      %v405 = vsel %vm269, %v240, 0
      %v408 = vsel %vm269, %v241, 0
      %v411 = vsel %vm269, %v242, 0
      %v414 = vsel %vm269, %v243, 0
      %v417 = vsel %vm269, %v244, 0
      %v420 = vsel %vm269, %v245, 0
      %v423 = vsel %vm269, %v246, 0
      %v426 = vsel %vm269, %v247, 0
      %v429 = vsel %vm269, %v248, 0
      %431 = vmatpush.msra.mxu0 0.0
      %432 = vmatpush.msra.mxu0 0.0
      %433 = vmatpush.msra.mxu0 0.0
      %434 = vmatpush.msra.mxu0 0.0
      %435 = vmatpush.msra.mxu0 0.0
      %436 = vmatpush.msra.mxu0 0.0
      %437 = vmatpush.msra.mxu0 0.0
      %438 = vmatpush.msra.mxu0 0.0
      %439 = vmatpush.msra.mxu0 0.0
      %440 = vmatpush.msra.mxu0 0.0
      %441 = vmatpush.msra.mxu0 0.0
      %442 = vmatpush.msra.mxu0 0.0
      %443 = vmatpush.msra.mxu0 0.0
      %444 = vmatpush.msra.mxu0 0.0
      %445 = vmatpush.msra.mxu0 %v250
      %446 = vmatpush.msra.mxu0 %v249
      %447 = vmatmul.f32.gmra.mxu0 %v384
      %v448 = vpop.f32.mrf.mxu0
      %v449 = vadd.f32 %v336, %v448
      %450 = vmatmul.f32.gmra.mxu0 %v387
      %v451 = vpop.f32.mrf.mxu0
      %v452 = vadd.f32 %v339, %v451
      %453 = vmatmul.f32.gmra.mxu0 %v390
      %v454 = vpop.f32.mrf.mxu0
      %v455 = vadd.f32 %v342, %v454
      %456 = vmatmul.f32.gmra.mxu0 %v393
      %v457 = vpop.f32.mrf.mxu0
      %v458 = vadd.f32 %v345, %v457
      %459 = vmatmul.f32.gmra.mxu0 %v396
      %v460 = vpop.f32.mrf.mxu0
      %v461 = vadd.f32 %v348, %v460
      %462 = vmatmul.f32.gmra.mxu0 %v399
      %v463 = vpop.f32.mrf.mxu0
      %v464 = vadd.f32 %v351, %v463
      %465 = vmatmul.f32.gmra.mxu0 %v402
      %v466 = vpop.f32.mrf.mxu0
      %v467 = vadd.f32 %v354, %v466
      %468 = vmatmul.f32.gmra.mxu0 %v405
      %v469 = vpop.f32.mrf.mxu0
      %v470 = vadd.f32 %v357, %v469
      %471 = vmatmul.f32.gmra.mxu0 %v408
      %v472 = vpop.f32.mrf.mxu0
      %v473 = vadd.f32 %v360, %v472
      %474 = vmatmul.f32.gmra.mxu0 %v411
      %v475 = vpop.f32.mrf.mxu0
      %v476 = vadd.f32 %v363, %v475
      %477 = vmatmul.f32.gmra.mxu0 %v414
      %v478 = vpop.f32.mrf.mxu0
      %v479 = vadd.f32 %v366, %v478
      %480 = vmatmul.f32.gmra.mxu0 %v417
      %v481 = vpop.f32.mrf.mxu0
      %v482 = vadd.f32 %v369, %v481
      %483 = vmatmul.f32.gmra.mxu0 %v420
      %v484 = vpop.f32.mrf.mxu0
      %v485 = vadd.f32 %v372, %v484
      %486 = vmatmul.f32.gmra.mxu0 %v423
      %v487 = vpop.f32.mrf.mxu0
      %v488 = vadd.f32 %v375, %v487
      %489 = vmatmul.f32.gmra.mxu0 %v426
      %v490 = vpop.f32.mrf.mxu0
      %v491 = vadd.f32 %v378, %v490
      %492 = vmatmul.f32.gmra.mxu0 %v429
      %v493 = vpop.f32.mrf.mxu0
      %v494 = vadd.f32 %v381, %v493
      %495 = vdwg.mxu0
      %v496 = vld [vmem:[%s224 + $0x2] sm:$0xff]
      %v497 = vld [vmem:[%s224 + $0x12] sm:$0xff]
      %v498 = vld [vmem:[%s224 + $0x22] sm:$0xff]
      %v499 = vld [vmem:[%s224 + $0x32] sm:$0xff]
      %v500 = vld [vmem:[%s224 + $0x42] sm:$0xff]
      %v501 = vld [vmem:[%s224 + $0x52] sm:$0xff]
      %v502 = vld [vmem:[%s224 + $0x62] sm:$0xff]
      %v503 = vld [vmem:[%s224 + $0x72] sm:$0xff]
      %v504 = vld [vmem:[%s224 + $0xa2] sm:$0xff]
      %v505 = vld [vmem:[%s224 + $0xb2] sm:$0xff]
      %v506 = vld [vmem:[%s224 + $0xc2] sm:$0xff]
      %v507 = vld [vmem:[%s224 + $0xd2] sm:$0xff]
      %v508 = vld [vmem:[%s224 + $0xe2] sm:$0xff]
      %v509 = vld [vmem:[%s224 + $0xf2] sm:$0xff]
      %v510 = vld [vmem:[%s224 + $0x102] sm:$0xff]
      %v511 = vld [vmem:[%s224 + $0x112] sm:$0xff]
      %v512 = vld [vmem:[%s1 + $0x20] sm:$0xff]
      %v513 = vld [vmem:[%s1 + $0x28] sm:$0xff]
      %v515 = vsel %vm269, %v496, 0
      %v518 = vsel %vm269, %v497, 0
      %v521 = vsel %vm269, %v498, 0
      %v524 = vsel %vm269, %v499, 0
      %v527 = vsel %vm269, %v500, 0
      %v530 = vsel %vm269, %v501, 0
      %v533 = vsel %vm269, %v502, 0
      %v536 = vsel %vm269, %v503, 0
      %v539 = vsel %vm269, %v504, 0
      %v542 = vsel %vm269, %v505, 0
      %v545 = vsel %vm269, %v506, 0
      %v548 = vsel %vm269, %v507, 0
      %v551 = vsel %vm269, %v508, 0
      %v554 = vsel %vm269, %v509, 0
      %v557 = vsel %vm269, %v510, 0
      %v560 = vsel %vm269, %v511, 0
      %562 = vmatpush.msra.mxu0 0.0
      %563 = vmatpush.msra.mxu0 0.0
      %564 = vmatpush.msra.mxu0 0.0
      %565 = vmatpush.msra.mxu0 0.0
      %566 = vmatpush.msra.mxu0 0.0
      %567 = vmatpush.msra.mxu0 0.0
      %568 = vmatpush.msra.mxu0 0.0
      %569 = vmatpush.msra.mxu0 0.0
      %570 = vmatpush.msra.mxu0 0.0
      %571 = vmatpush.msra.mxu0 0.0
      %572 = vmatpush.msra.mxu0 0.0
      %573 = vmatpush.msra.mxu0 0.0
      %574 = vmatpush.msra.mxu0 0.0
      %575 = vmatpush.msra.mxu0 0.0
      %576 = vmatpush.msra.mxu0 %v513
      %577 = vmatpush.msra.mxu0 %v512
      %578 = vmatmul.f32.gmra.mxu0 %v515
      %v579 = vpop.f32.mrf.mxu0
      %v580 = vadd.f32 0.0, %v579
      %581 = vmatmul.f32.gmra.mxu0 %v518
      %v582 = vpop.f32.mrf.mxu0
      %v583 = vadd.f32 0.0, %v582
      %584 = vmatmul.f32.gmra.mxu0 %v521
      %v585 = vpop.f32.mrf.mxu0
      %v586 = vadd.f32 0.0, %v585
      %587 = vmatmul.f32.gmra.mxu0 %v524
      %v588 = vpop.f32.mrf.mxu0
      %v589 = vadd.f32 0.0, %v588
      %590 = vmatmul.f32.gmra.mxu0 %v527
      %v591 = vpop.f32.mrf.mxu0
      %v592 = vadd.f32 0.0, %v591
      %593 = vmatmul.f32.gmra.mxu0 %v530
      %v594 = vpop.f32.mrf.mxu0
      %v595 = vadd.f32 0.0, %v594
      %596 = vmatmul.f32.gmra.mxu0 %v533
      %v597 = vpop.f32.mrf.mxu0
      %v598 = vadd.f32 0.0, %v597
      %599 = vmatmul.f32.gmra.mxu0 %v536
      %v600 = vpop.f32.mrf.mxu0
      %v601 = vadd.f32 0.0, %v600
      %602 = vmatmul.f32.gmra.mxu0 %v539
      %v603 = vpop.f32.mrf.mxu0
      %v604 = vadd.f32 0.0, %v603
      %605 = vmatmul.f32.gmra.mxu0 %v542
      %v606 = vpop.f32.mrf.mxu0
      %v607 = vadd.f32 0.0, %v606
      %608 = vmatmul.f32.gmra.mxu0 %v545
      %v609 = vpop.f32.mrf.mxu0
      %v610 = vadd.f32 0.0, %v609
      %611 = vmatmul.f32.gmra.mxu0 %v548
      %v612 = vpop.f32.mrf.mxu0
      %v613 = vadd.f32 0.0, %v612
      %614 = vmatmul.f32.gmra.mxu0 %v551
      %v615 = vpop.f32.mrf.mxu0
      %v616 = vadd.f32 0.0, %v615
      %617 = vmatmul.f32.gmra.mxu0 %v554
      %v618 = vpop.f32.mrf.mxu0
      %v619 = vadd.f32 0.0, %v618
      %620 = vmatmul.f32.gmra.mxu0 %v557
      %v621 = vpop.f32.mrf.mxu0
      %v622 = vadd.f32 0.0, %v621
      %623 = vmatmul.f32.gmra.mxu0 %v560
      %v624 = vpop.f32.mrf.mxu0
      %v625 = vadd.f32 0.0, %v624
      %626 = vdwg.mxu0
      %v627 = vadd.f32 %v449, %v580
      %v628 = vadd.f32 %v452, %v583
      %v629 = vadd.f32 %v455, %v586
      %v630 = vadd.f32 %v458, %v589
      %v631 = vadd.f32 %v461, %v592
      %v632 = vadd.f32 %v464, %v595
      %v633 = vadd.f32 %v467, %v598
      %v634 = vadd.f32 %v470, %v601
      %v635 = vadd.f32 %v473, %v604
      %v636 = vadd.f32 %v476, %v607
      %v637 = vadd.f32 %v479, %v610
      %v638 = vadd.f32 %v482, %v613
      %v639 = vadd.f32 %v485, %v616
      %v640 = vadd.f32 %v488, %v619
      %v641 = vadd.f32 %v491, %v622
      %v642 = vadd.f32 %v494, %v625
      %s643 = scalar_lea.vmem %s224, 16
      %v644 = vld [vmem:[%s643] sm:$0xff]
      %v645 = vld [vmem:[%s643 + $0x10] sm:$0xff]
      %v646 = vld [vmem:[%s643 + $0x20] sm:$0xff]
      %v647 = vld [vmem:[%s643 + $0x30] sm:$0xff]
      %v648 = vld [vmem:[%s643 + $0x40] sm:$0xff]
      %v649 = vld [vmem:[%s643 + $0x50] sm:$0xff]
      %v650 = vld [vmem:[%s643 + $0x60] sm:$0xff]
      %v651 = vld [vmem:[%s643 + $0x70] sm:$0xff]
      %v652 = vld [vmem:[%s643 + $0xa0] sm:$0xff]
      %v653 = vld [vmem:[%s643 + $0xb0] sm:$0xff]
      %v654 = vld [vmem:[%s643 + $0xc0] sm:$0xff]
      %v655 = vld [vmem:[%s643 + $0xd0] sm:$0xff]
      %v656 = vld [vmem:[%s643 + $0xe0] sm:$0xff]
      %v657 = vld [vmem:[%s643 + $0xf0] sm:$0xff]
      %v658 = vld [vmem:[%s643 + $0x100] sm:$0xff]
      %v659 = vld [vmem:[%s643 + $0x110] sm:$0xff]
      %v660 = vld [vmem:[%s1 + $0x30] sm:$0xff]
      %v661 = vld [vmem:[%s1 + $0x38] sm:$0xff]
      %v663 = vsel %vm269, %v644, 0
      %v666 = vsel %vm269, %v645, 0
      %v669 = vsel %vm269, %v646, 0
      %v672 = vsel %vm269, %v647, 0
      %v675 = vsel %vm269, %v648, 0
      %v678 = vsel %vm269, %v649, 0
      %v681 = vsel %vm269, %v650, 0
      %v684 = vsel %vm269, %v651, 0
      %v687 = vsel %vm269, %v652, 0
      %v690 = vsel %vm269, %v653, 0
      %v693 = vsel %vm269, %v654, 0
      %v696 = vsel %vm269, %v655, 0
      %v699 = vsel %vm269, %v656, 0
      %v702 = vsel %vm269, %v657, 0
      %v705 = vsel %vm269, %v658, 0
      %v708 = vsel %vm269, %v659, 0
      %710 = vmatpush.msra.mxu0 0.0
      %711 = vmatpush.msra.mxu0 0.0
      %712 = vmatpush.msra.mxu0 0.0
      %713 = vmatpush.msra.mxu0 0.0
      %714 = vmatpush.msra.mxu0 0.0
      %715 = vmatpush.msra.mxu0 0.0
      %716 = vmatpush.msra.mxu0 0.0
      %717 = vmatpush.msra.mxu0 0.0
      %718 = vmatpush.msra.mxu0 0.0
      %719 = vmatpush.msra.mxu0 0.0
      %720 = vmatpush.msra.mxu0 0.0
      %721 = vmatpush.msra.mxu0 0.0
      %722 = vmatpush.msra.mxu0 0.0
      %723 = vmatpush.msra.mxu0 0.0
      %724 = vmatpush.msra.mxu0 %v661
      %725 = vmatpush.msra.mxu0 %v660
      %726 = vmatmul.f32.gmra.mxu0 %v663
      %v727 = vpop.f32.mrf.mxu0
      %v728 = vadd.f32 0.0, %v727
      %729 = vmatmul.f32.gmra.mxu0 %v666
      %v730 = vpop.f32.mrf.mxu0
      %v731 = vadd.f32 0.0, %v730
      %732 = vmatmul.f32.gmra.mxu0 %v669
      %v733 = vpop.f32.mrf.mxu0
      %v734 = vadd.f32 0.0, %v733
      %735 = vmatmul.f32.gmra.mxu0 %v672
      %v736 = vpop.f32.mrf.mxu0
      %v737 = vadd.f32 0.0, %v736
      %738 = vmatmul.f32.gmra.mxu0 %v675
      %v739 = vpop.f32.mrf.mxu0
      %v740 = vadd.f32 0.0, %v739
      %741 = vmatmul.f32.gmra.mxu0 %v678
      %v742 = vpop.f32.mrf.mxu0
      %v743 = vadd.f32 0.0, %v742
      %744 = vmatmul.f32.gmra.mxu0 %v681
      %v745 = vpop.f32.mrf.mxu0
      %v746 = vadd.f32 0.0, %v745
      %747 = vmatmul.f32.gmra.mxu0 %v684
      %v748 = vpop.f32.mrf.mxu0
      %v749 = vadd.f32 0.0, %v748
      %750 = vmatmul.f32.gmra.mxu0 %v687
      %v751 = vpop.f32.mrf.mxu0
      %v752 = vadd.f32 0.0, %v751
      %753 = vmatmul.f32.gmra.mxu0 %v690
      %v754 = vpop.f32.mrf.mxu0
      %v755 = vadd.f32 0.0, %v754
      %756 = vmatmul.f32.gmra.mxu0 %v693
      %v757 = vpop.f32.mrf.mxu0
      %v758 = vadd.f32 0.0, %v757
      %759 = vmatmul.f32.gmra.mxu0 %v696
      %v760 = vpop.f32.mrf.mxu0
      %v761 = vadd.f32 0.0, %v760
      %762 = vmatmul.f32.gmra.mxu0 %v699
      %v763 = vpop.f32.mrf.mxu0
      %v764 = vadd.f32 0.0, %v763
      %765 = vmatmul.f32.gmra.mxu0 %v702
      %v766 = vpop.f32.mrf.mxu0
      %v767 = vadd.f32 0.0, %v766
      %768 = vmatmul.f32.gmra.mxu0 %v705
      %v769 = vpop.f32.mrf.mxu0
      %v770 = vadd.f32 0.0, %v769
      %771 = vmatmul.f32.gmra.mxu0 %v708
      %v772 = vpop.f32.mrf.mxu0
      %v773 = vadd.f32 0.0, %v772
      %774 = vdwg.mxu0
      %v775 = vadd.f32 %v627, %v728
      %v776 = vadd.f32 %v628, %v731
      %v777 = vadd.f32 %v629, %v734
      %v778 = vadd.f32 %v630, %v737
      %v779 = vadd.f32 %v631, %v740
      %v780 = vadd.f32 %v632, %v743
      %v781 = vadd.f32 %v633, %v746
      %v782 = vadd.f32 %v634, %v749
      %v783 = vadd.f32 %v635, %v752
      %v784 = vadd.f32 %v636, %v755
      %v785 = vadd.f32 %v637, %v758
      %v786 = vadd.f32 %v638, %v761
      %v787 = vadd.f32 %v639, %v764
      %v788 = vadd.f32 %v640, %v767
      %v789 = vadd.f32 %v641, %v770
      %v790 = vadd.f32 %v642, %v773
      %v791 = vld [vmem:[%s643 + $0x1] sm:$0xff]
      %v792 = vld [vmem:[%s643 + $0x11] sm:$0xff]
      %v793 = vld [vmem:[%s643 + $0x21] sm:$0xff]
      %v794 = vld [vmem:[%s643 + $0x31] sm:$0xff]
      %v795 = vld [vmem:[%s643 + $0x41] sm:$0xff]
      %v796 = vld [vmem:[%s643 + $0x51] sm:$0xff]
      %v797 = vld [vmem:[%s643 + $0x61] sm:$0xff]
      %v798 = vld [vmem:[%s643 + $0x71] sm:$0xff]
      %v799 = vld [vmem:[%s643 + $0xa1] sm:$0xff]
      %v800 = vld [vmem:[%s643 + $0xb1] sm:$0xff]
      %v801 = vld [vmem:[%s643 + $0xc1] sm:$0xff]
      %v802 = vld [vmem:[%s643 + $0xd1] sm:$0xff]
      %v803 = vld [vmem:[%s643 + $0xe1] sm:$0xff]
      %v804 = vld [vmem:[%s643 + $0xf1] sm:$0xff]
      %v805 = vld [vmem:[%s643 + $0x101] sm:$0xff]
      %v806 = vld [vmem:[%s643 + $0x111] sm:$0xff]
      %v807 = vld [vmem:[%s1 + $0x40] sm:$0xff]
      %v808 = vld [vmem:[%s1 + $0x48] sm:$0xff]
      %v810 = vsel %vm269, %v791, 0
      %v813 = vsel %vm269, %v792, 0
      %v816 = vsel %vm269, %v793, 0
      %v819 = vsel %vm269, %v794, 0
      %v822 = vsel %vm269, %v795, 0
      %v825 = vsel %vm269, %v796, 0
      %v828 = vsel %vm269, %v797, 0
      %v831 = vsel %vm269, %v798, 0
      %v834 = vsel %vm269, %v799, 0
      %v837 = vsel %vm269, %v800, 0
      %v840 = vsel %vm269, %v801, 0
      %v843 = vsel %vm269, %v802, 0
      %v846 = vsel %vm269, %v803, 0
      %v849 = vsel %vm269, %v804, 0
      %v852 = vsel %vm269, %v805, 0
      %v855 = vsel %vm269, %v806, 0
      %857 = vmatpush.msra.mxu0 0.0
      %858 = vmatpush.msra.mxu0 0.0
      %859 = vmatpush.msra.mxu0 0.0
      %860 = vmatpush.msra.mxu0 0.0
      %861 = vmatpush.msra.mxu0 0.0
      %862 = vmatpush.msra.mxu0 0.0
      %863 = vmatpush.msra.mxu0 0.0
      %864 = vmatpush.msra.mxu0 0.0
      %865 = vmatpush.msra.mxu0 0.0
      %866 = vmatpush.msra.mxu0 0.0
      %867 = vmatpush.msra.mxu0 0.0
      %868 = vmatpush.msra.mxu0 0.0
      %869 = vmatpush.msra.mxu0 0.0
      %870 = vmatpush.msra.mxu0 0.0
      %871 = vmatpush.msra.mxu0 %v808
      %872 = vmatpush.msra.mxu0 %v807
      %873 = vmatmul.f32.gmra.mxu0 %v810
      %v874 = vpop.f32.mrf.mxu0
      %v875 = vadd.f32 0.0, %v874
      %876 = vmatmul.f32.gmra.mxu0 %v813
      %v877 = vpop.f32.mrf.mxu0
      %v878 = vadd.f32 0.0, %v877
      %879 = vmatmul.f32.gmra.mxu0 %v816
      %v880 = vpop.f32.mrf.mxu0
      %v881 = vadd.f32 0.0, %v880
      %882 = vmatmul.f32.gmra.mxu0 %v819
      %v883 = vpop.f32.mrf.mxu0
      %v884 = vadd.f32 0.0, %v883
      %885 = vmatmul.f32.gmra.mxu0 %v822
      %v886 = vpop.f32.mrf.mxu0
      %v887 = vadd.f32 0.0, %v886
      %888 = vmatmul.f32.gmra.mxu0 %v825
      %v889 = vpop.f32.mrf.mxu0
      %v890 = vadd.f32 0.0, %v889
      %891 = vmatmul.f32.gmra.mxu0 %v828
      %v892 = vpop.f32.mrf.mxu0
      %v893 = vadd.f32 0.0, %v892
      %894 = vmatmul.f32.gmra.mxu0 %v831
      %v895 = vpop.f32.mrf.mxu0
      %v896 = vadd.f32 0.0, %v895
      %897 = vmatmul.f32.gmra.mxu0 %v834
      %v898 = vpop.f32.mrf.mxu0
      %v899 = vadd.f32 0.0, %v898
      %900 = vmatmul.f32.gmra.mxu0 %v837
      %v901 = vpop.f32.mrf.mxu0
      %v902 = vadd.f32 0.0, %v901
      %903 = vmatmul.f32.gmra.mxu0 %v840
      %v904 = vpop.f32.mrf.mxu0
      %v905 = vadd.f32 0.0, %v904
      %906 = vmatmul.f32.gmra.mxu0 %v843
      %v907 = vpop.f32.mrf.mxu0
      %v908 = vadd.f32 0.0, %v907
      %909 = vmatmul.f32.gmra.mxu0 %v846
      %v910 = vpop.f32.mrf.mxu0
      %v911 = vadd.f32 0.0, %v910
      %912 = vmatmul.f32.gmra.mxu0 %v849
      %v913 = vpop.f32.mrf.mxu0
      %v914 = vadd.f32 0.0, %v913
      %915 = vmatmul.f32.gmra.mxu0 %v852
      %v916 = vpop.f32.mrf.mxu0
      %v917 = vadd.f32 0.0, %v916
      %918 = vmatmul.f32.gmra.mxu0 %v855
      %v919 = vpop.f32.mrf.mxu0
      %v920 = vadd.f32 0.0, %v919
      %921 = vdwg.mxu0
      %v922 = vadd.f32 %v775, %v875
      %v923 = vadd.f32 %v776, %v878
      %v924 = vadd.f32 %v777, %v881
      %v925 = vadd.f32 %v778, %v884
      %v926 = vadd.f32 %v779, %v887
      %v927 = vadd.f32 %v780, %v890
      %v928 = vadd.f32 %v781, %v893
      %v929 = vadd.f32 %v782, %v896
      %v930 = vadd.f32 %v783, %v899
      %v931 = vadd.f32 %v784, %v902
      %v932 = vadd.f32 %v785, %v905
      %v933 = vadd.f32 %v786, %v908
      %v934 = vadd.f32 %v787, %v911
      %v935 = vadd.f32 %v788, %v914
      %v936 = vadd.f32 %v789, %v917
      %v937 = vadd.f32 %v790, %v920
      %v938 = vld [vmem:[%s643 + $0x2] sm:$0xff]
      %v939 = vld [vmem:[%s643 + $0x12] sm:$0xff]
      %v940 = vld [vmem:[%s643 + $0x22] sm:$0xff]
      %v941 = vld [vmem:[%s643 + $0x32] sm:$0xff]
      %v942 = vld [vmem:[%s643 + $0x42] sm:$0xff]
      %v943 = vld [vmem:[%s643 + $0x52] sm:$0xff]
      %v944 = vld [vmem:[%s643 + $0x62] sm:$0xff]
      %v945 = vld [vmem:[%s643 + $0x72] sm:$0xff]
      %v946 = vld [vmem:[%s643 + $0xa2] sm:$0xff]
      %v947 = vld [vmem:[%s643 + $0xb2] sm:$0xff]
      %v948 = vld [vmem:[%s643 + $0xc2] sm:$0xff]
      %v949 = vld [vmem:[%s643 + $0xd2] sm:$0xff]
      %v950 = vld [vmem:[%s643 + $0xe2] sm:$0xff]
      %v951 = vld [vmem:[%s643 + $0xf2] sm:$0xff]
      %v952 = vld [vmem:[%s643 + $0x102] sm:$0xff]
      %v953 = vld [vmem:[%s643 + $0x112] sm:$0xff]
      %v954 = vld [vmem:[%s1 + $0x50] sm:$0xff]
      %v955 = vld [vmem:[%s1 + $0x58] sm:$0xff]
      %v957 = vsel %vm269, %v938, 0
      %v960 = vsel %vm269, %v939, 0
      %v963 = vsel %vm269, %v940, 0
      %v966 = vsel %vm269, %v941, 0
      %v969 = vsel %vm269, %v942, 0
      %v972 = vsel %vm269, %v943, 0
      %v975 = vsel %vm269, %v944, 0
      %v978 = vsel %vm269, %v945, 0
      %v981 = vsel %vm269, %v946, 0
      %v984 = vsel %vm269, %v947, 0
      %v987 = vsel %vm269, %v948, 0
      %v990 = vsel %vm269, %v949, 0
      %v993 = vsel %vm269, %v950, 0
      %v996 = vsel %vm269, %v951, 0
      %v999 = vsel %vm269, %v952, 0
      %v1002 = vsel %vm269, %v953, 0
      %1004 = vmatpush.msra.mxu0 0.0
      %1005 = vmatpush.msra.mxu0 0.0
      %1006 = vmatpush.msra.mxu0 0.0
      %1007 = vmatpush.msra.mxu0 0.0
      %1008 = vmatpush.msra.mxu0 0.0
      %1009 = vmatpush.msra.mxu0 0.0
      %1010 = vmatpush.msra.mxu0 0.0
      %1011 = vmatpush.msra.mxu0 0.0
      %1012 = vmatpush.msra.mxu0 0.0
      %1013 = vmatpush.msra.mxu0 0.0
      %1014 = vmatpush.msra.mxu0 0.0
      %1015 = vmatpush.msra.mxu0 0.0
      %1016 = vmatpush.msra.mxu0 0.0
      %1017 = vmatpush.msra.mxu0 0.0
      %1018 = vmatpush.msra.mxu0 %v955
      %1019 = vmatpush.msra.mxu0 %v954
      %1020 = vmatmul.f32.gmra.mxu0 %v957
      %v1021 = vpop.f32.mrf.mxu0
      %v1022 = vadd.f32 0.0, %v1021
      %1023 = vmatmul.f32.gmra.mxu0 %v960
      %v1024 = vpop.f32.mrf.mxu0
      %v1025 = vadd.f32 0.0, %v1024
      %1026 = vmatmul.f32.gmra.mxu0 %v963
      %v1027 = vpop.f32.mrf.mxu0
      %v1028 = vadd.f32 0.0, %v1027
      %1029 = vmatmul.f32.gmra.mxu0 %v966
      %v1030 = vpop.f32.mrf.mxu0
      %v1031 = vadd.f32 0.0, %v1030
      %1032 = vmatmul.f32.gmra.mxu0 %v969
      %v1033 = vpop.f32.mrf.mxu0
      %v1034 = vadd.f32 0.0, %v1033
      %1035 = vmatmul.f32.gmra.mxu0 %v972
      %v1036 = vpop.f32.mrf.mxu0
      %v1037 = vadd.f32 0.0, %v1036
      %1038 = vmatmul.f32.gmra.mxu0 %v975
      %v1039 = vpop.f32.mrf.mxu0
      %v1040 = vadd.f32 0.0, %v1039
      %1041 = vmatmul.f32.gmra.mxu0 %v978
      %v1042 = vpop.f32.mrf.mxu0
      %v1043 = vadd.f32 0.0, %v1042
      %1044 = vmatmul.f32.gmra.mxu0 %v981
      %v1045 = vpop.f32.mrf.mxu0
      %v1046 = vadd.f32 0.0, %v1045
      %1047 = vmatmul.f32.gmra.mxu0 %v984
      %v1048 = vpop.f32.mrf.mxu0
      %v1049 = vadd.f32 0.0, %v1048
      %1050 = vmatmul.f32.gmra.mxu0 %v987
      %v1051 = vpop.f32.mrf.mxu0
      %v1052 = vadd.f32 0.0, %v1051
      %1053 = vmatmul.f32.gmra.mxu0 %v990
      %v1054 = vpop.f32.mrf.mxu0
      %v1055 = vadd.f32 0.0, %v1054
      %1056 = vmatmul.f32.gmra.mxu0 %v993
      %v1057 = vpop.f32.mrf.mxu0
      %v1058 = vadd.f32 0.0, %v1057
      %1059 = vmatmul.f32.gmra.mxu0 %v996
      %v1060 = vpop.f32.mrf.mxu0
      %v1061 = vadd.f32 0.0, %v1060
      %1062 = vmatmul.f32.gmra.mxu0 %v999
      %v1063 = vpop.f32.mrf.mxu0
      %v1064 = vadd.f32 0.0, %v1063
      %1065 = vmatmul.f32.gmra.mxu0 %v1002
      %v1066 = vpop.f32.mrf.mxu0
      %v1067 = vadd.f32 0.0, %v1066
      %1068 = vdwg.mxu0
      %v1069 = vadd.f32 %v922, %v1022
      %v1070 = vadd.f32 %v923, %v1025
      %v1071 = vadd.f32 %v924, %v1028
      %v1072 = vadd.f32 %v925, %v1031
      %v1073 = vadd.f32 %v926, %v1034
      %v1074 = vadd.f32 %v927, %v1037
      %v1075 = vadd.f32 %v928, %v1040
      %v1076 = vadd.f32 %v929, %v1043
      %v1077 = vadd.f32 %v930, %v1046
      %v1078 = vadd.f32 %v931, %v1049
      %v1079 = vadd.f32 %v932, %v1052
      %v1080 = vadd.f32 %v933, %v1055
      %v1081 = vadd.f32 %v934, %v1058
      %v1082 = vadd.f32 %v935, %v1061
      %v1083 = vadd.f32 %v936, %v1064
      %v1084 = vadd.f32 %v937, %v1067
      %s1085 = scalar_lea.vmem %s224, 32
      %v1086 = vld [vmem:[%s1085] sm:$0xff]
      %v1087 = vld [vmem:[%s1085 + $0x10] sm:$0xff]
      %v1088 = vld [vmem:[%s1085 + $0x20] sm:$0xff]
      %v1089 = vld [vmem:[%s1085 + $0x30] sm:$0xff]
      %v1090 = vld [vmem:[%s1085 + $0x40] sm:$0xff]
      %v1091 = vld [vmem:[%s1085 + $0x50] sm:$0xff]
      %v1092 = vld [vmem:[%s1085 + $0x60] sm:$0xff]
      %v1093 = vld [vmem:[%s1085 + $0x70] sm:$0xff]
      %v1094 = vld [vmem:[%s1085 + $0xa0] sm:$0xff]
      %v1095 = vld [vmem:[%s1085 + $0xb0] sm:$0xff]
      %v1096 = vld [vmem:[%s1085 + $0xc0] sm:$0xff]
      %v1097 = vld [vmem:[%s1085 + $0xd0] sm:$0xff]
      %v1098 = vld [vmem:[%s1085 + $0xe0] sm:$0xff]
      %v1099 = vld [vmem:[%s1085 + $0xf0] sm:$0xff]
      %v1100 = vld [vmem:[%s1085 + $0x100] sm:$0xff]
      %v1101 = vld [vmem:[%s1085 + $0x110] sm:$0xff]
      %v1102 = vld [vmem:[%s1 + $0x60] sm:$0xff]
      %v1103 = vld [vmem:[%s1 + $0x68] sm:$0xff]
      %v1105 = vsel %vm269, %v1086, 0
      %v1108 = vsel %vm269, %v1087, 0
      %v1111 = vsel %vm269, %v1088, 0
      %v1114 = vsel %vm269, %v1089, 0
      %v1117 = vsel %vm269, %v1090, 0
      %v1120 = vsel %vm269, %v1091, 0
      %v1123 = vsel %vm269, %v1092, 0
      %v1126 = vsel %vm269, %v1093, 0
      %v1129 = vsel %vm269, %v1094, 0
      %v1132 = vsel %vm269, %v1095, 0
      %v1135 = vsel %vm269, %v1096, 0
      %v1138 = vsel %vm269, %v1097, 0
      %v1141 = vsel %vm269, %v1098, 0
      %v1144 = vsel %vm269, %v1099, 0
      %v1147 = vsel %vm269, %v1100, 0
      %v1150 = vsel %vm269, %v1101, 0
      %1152 = vmatpush.msra.mxu0 0.0
      %1153 = vmatpush.msra.mxu0 0.0
      %1154 = vmatpush.msra.mxu0 0.0
      %1155 = vmatpush.msra.mxu0 0.0
      %1156 = vmatpush.msra.mxu0 0.0
      %1157 = vmatpush.msra.mxu0 0.0
      %1158 = vmatpush.msra.mxu0 0.0
      %1159 = vmatpush.msra.mxu0 0.0
      %1160 = vmatpush.msra.mxu0 0.0
      %1161 = vmatpush.msra.mxu0 0.0
      %1162 = vmatpush.msra.mxu0 0.0
      %1163 = vmatpush.msra.mxu0 0.0
      %1164 = vmatpush.msra.mxu0 0.0
      %1165 = vmatpush.msra.mxu0 0.0
      %1166 = vmatpush.msra.mxu0 %v1103
      %1167 = vmatpush.msra.mxu0 %v1102
      %1168 = vmatmul.f32.gmra.mxu0 %v1105
      %v1169 = vpop.f32.mrf.mxu0
      %v1170 = vadd.f32 0.0, %v1169
      %1171 = vmatmul.f32.gmra.mxu0 %v1108
      %v1172 = vpop.f32.mrf.mxu0
      %v1173 = vadd.f32 0.0, %v1172
      %1174 = vmatmul.f32.gmra.mxu0 %v1111
      %v1175 = vpop.f32.mrf.mxu0
      %v1176 = vadd.f32 0.0, %v1175
      %1177 = vmatmul.f32.gmra.mxu0 %v1114
      %v1178 = vpop.f32.mrf.mxu0
      %v1179 = vadd.f32 0.0, %v1178
      %1180 = vmatmul.f32.gmra.mxu0 %v1117
      %v1181 = vpop.f32.mrf.mxu0
      %v1182 = vadd.f32 0.0, %v1181
      %1183 = vmatmul.f32.gmra.mxu0 %v1120
      %v1184 = vpop.f32.mrf.mxu0
      %v1185 = vadd.f32 0.0, %v1184
      %1186 = vmatmul.f32.gmra.mxu0 %v1123
      %v1187 = vpop.f32.mrf.mxu0
      %v1188 = vadd.f32 0.0, %v1187
      %1189 = vmatmul.f32.gmra.mxu0 %v1126
      %v1190 = vpop.f32.mrf.mxu0
      %v1191 = vadd.f32 0.0, %v1190
      %1192 = vmatmul.f32.gmra.mxu0 %v1129
      %v1193 = vpop.f32.mrf.mxu0
      %v1194 = vadd.f32 0.0, %v1193
      %1195 = vmatmul.f32.gmra.mxu0 %v1132
      %v1196 = vpop.f32.mrf.mxu0
      %v1197 = vadd.f32 0.0, %v1196
      %1198 = vmatmul.f32.gmra.mxu0 %v1135
      %v1199 = vpop.f32.mrf.mxu0
      %v1200 = vadd.f32 0.0, %v1199
      %1201 = vmatmul.f32.gmra.mxu0 %v1138
      %v1202 = vpop.f32.mrf.mxu0
      %v1203 = vadd.f32 0.0, %v1202
      %1204 = vmatmul.f32.gmra.mxu0 %v1141
      %v1205 = vpop.f32.mrf.mxu0
      %v1206 = vadd.f32 0.0, %v1205
      %1207 = vmatmul.f32.gmra.mxu0 %v1144
      %v1208 = vpop.f32.mrf.mxu0
      %v1209 = vadd.f32 0.0, %v1208
      %1210 = vmatmul.f32.gmra.mxu0 %v1147
      %v1211 = vpop.f32.mrf.mxu0
      %v1212 = vadd.f32 0.0, %v1211
      %1213 = vmatmul.f32.gmra.mxu0 %v1150
      %v1214 = vpop.f32.mrf.mxu0
      %v1215 = vadd.f32 0.0, %v1214
      %1216 = vdwg.mxu0
      %v1217 = vadd.f32 %v1069, %v1170
      %v1218 = vadd.f32 %v1070, %v1173
      %v1219 = vadd.f32 %v1071, %v1176
      %v1220 = vadd.f32 %v1072, %v1179
      %v1221 = vadd.f32 %v1073, %v1182
      %v1222 = vadd.f32 %v1074, %v1185
      %v1223 = vadd.f32 %v1075, %v1188
      %v1224 = vadd.f32 %v1076, %v1191
      %v1225 = vadd.f32 %v1077, %v1194
      %v1226 = vadd.f32 %v1078, %v1197
      %v1227 = vadd.f32 %v1079, %v1200
      %v1228 = vadd.f32 %v1080, %v1203
      %v1229 = vadd.f32 %v1081, %v1206
      %v1230 = vadd.f32 %v1082, %v1209
      %v1231 = vadd.f32 %v1083, %v1212
      %v1232 = vadd.f32 %v1084, %v1215
      %v1233 = vld [vmem:[%s1085 + $0x1] sm:$0xff]
      %v1234 = vld [vmem:[%s1085 + $0x11] sm:$0xff]
      %v1235 = vld [vmem:[%s1085 + $0x21] sm:$0xff]
      %v1236 = vld [vmem:[%s1085 + $0x31] sm:$0xff]
      %v1237 = vld [vmem:[%s1085 + $0x41] sm:$0xff]
      %v1238 = vld [vmem:[%s1085 + $0x51] sm:$0xff]
      %v1239 = vld [vmem:[%s1085 + $0x61] sm:$0xff]
      %v1240 = vld [vmem:[%s1085 + $0x71] sm:$0xff]
      %v1241 = vld [vmem:[%s1085 + $0xa1] sm:$0xff]
      %v1242 = vld [vmem:[%s1085 + $0xb1] sm:$0xff]
      %v1243 = vld [vmem:[%s1085 + $0xc1] sm:$0xff]
      %v1244 = vld [vmem:[%s1085 + $0xd1] sm:$0xff]
      %v1245 = vld [vmem:[%s1085 + $0xe1] sm:$0xff]
      %v1246 = vld [vmem:[%s1085 + $0xf1] sm:$0xff]
      %v1247 = vld [vmem:[%s1085 + $0x101] sm:$0xff]
      %v1248 = vld [vmem:[%s1085 + $0x111] sm:$0xff]
      %v1249 = vld [vmem:[%s1 + $0x70] sm:$0xff]
      %v1250 = vld [vmem:[%s1 + $0x78] sm:$0xff]
      %v1252 = vsel %vm269, %v1233, 0
      %v1255 = vsel %vm269, %v1234, 0
      %v1258 = vsel %vm269, %v1235, 0
      %v1261 = vsel %vm269, %v1236, 0
      %v1264 = vsel %vm269, %v1237, 0
      %v1267 = vsel %vm269, %v1238, 0
      %v1270 = vsel %vm269, %v1239, 0
      %v1273 = vsel %vm269, %v1240, 0
      %v1276 = vsel %vm269, %v1241, 0
      %v1279 = vsel %vm269, %v1242, 0
      %v1282 = vsel %vm269, %v1243, 0
      %v1285 = vsel %vm269, %v1244, 0
      %v1288 = vsel %vm269, %v1245, 0
      %v1291 = vsel %vm269, %v1246, 0
      %v1294 = vsel %vm269, %v1247, 0
      %v1297 = vsel %vm269, %v1248, 0
      %1299 = vmatpush.msra.mxu0 0.0
      %1300 = vmatpush.msra.mxu0 0.0
      %1301 = vmatpush.msra.mxu0 0.0
      %1302 = vmatpush.msra.mxu0 0.0
      %1303 = vmatpush.msra.mxu0 0.0
      %1304 = vmatpush.msra.mxu0 0.0
      %1305 = vmatpush.msra.mxu0 0.0
      %1306 = vmatpush.msra.mxu0 0.0
      %1307 = vmatpush.msra.mxu0 0.0
      %1308 = vmatpush.msra.mxu0 0.0
      %1309 = vmatpush.msra.mxu0 0.0
      %1310 = vmatpush.msra.mxu0 0.0
      %1311 = vmatpush.msra.mxu0 0.0
      %1312 = vmatpush.msra.mxu0 0.0
      %1313 = vmatpush.msra.mxu0 %v1250
      %1314 = vmatpush.msra.mxu0 %v1249
      %1315 = vmatmul.f32.gmra.mxu0 %v1252
      %v1316 = vpop.f32.mrf.mxu0
      %v1317 = vadd.f32 0.0, %v1316
      %1318 = vmatmul.f32.gmra.mxu0 %v1255
      %v1319 = vpop.f32.mrf.mxu0
      %v1320 = vadd.f32 0.0, %v1319
      %1321 = vmatmul.f32.gmra.mxu0 %v1258
      %v1322 = vpop.f32.mrf.mxu0
      %v1323 = vadd.f32 0.0, %v1322
      %1324 = vmatmul.f32.gmra.mxu0 %v1261
      %v1325 = vpop.f32.mrf.mxu0
      %v1326 = vadd.f32 0.0, %v1325
      %1327 = vmatmul.f32.gmra.mxu0 %v1264
      %v1328 = vpop.f32.mrf.mxu0
      %v1329 = vadd.f32 0.0, %v1328
      %1330 = vmatmul.f32.gmra.mxu0 %v1267
      %v1331 = vpop.f32.mrf.mxu0
      %v1332 = vadd.f32 0.0, %v1331
      %1333 = vmatmul.f32.gmra.mxu0 %v1270
      %v1334 = vpop.f32.mrf.mxu0
      %v1335 = vadd.f32 0.0, %v1334
      %1336 = vmatmul.f32.gmra.mxu0 %v1273
      %v1337 = vpop.f32.mrf.mxu0
      %v1338 = vadd.f32 0.0, %v1337
      %1339 = vmatmul.f32.gmra.mxu0 %v1276
      %v1340 = vpop.f32.mrf.mxu0
      %v1341 = vadd.f32 0.0, %v1340
      %1342 = vmatmul.f32.gmra.mxu0 %v1279
      %v1343 = vpop.f32.mrf.mxu0
      %v1344 = vadd.f32 0.0, %v1343
      %1345 = vmatmul.f32.gmra.mxu0 %v1282
      %v1346 = vpop.f32.mrf.mxu0
      %v1347 = vadd.f32 0.0, %v1346
      %1348 = vmatmul.f32.gmra.mxu0 %v1285
      %v1349 = vpop.f32.mrf.mxu0
      %v1350 = vadd.f32 0.0, %v1349
      %1351 = vmatmul.f32.gmra.mxu0 %v1288
      %v1352 = vpop.f32.mrf.mxu0
      %v1353 = vadd.f32 0.0, %v1352
      %1354 = vmatmul.f32.gmra.mxu0 %v1291
      %v1355 = vpop.f32.mrf.mxu0
      %v1356 = vadd.f32 0.0, %v1355
      %1357 = vmatmul.f32.gmra.mxu0 %v1294
      %v1358 = vpop.f32.mrf.mxu0
      %v1359 = vadd.f32 0.0, %v1358
      %1360 = vmatmul.f32.gmra.mxu0 %v1297
      %v1361 = vpop.f32.mrf.mxu0
      %v1362 = vadd.f32 0.0, %v1361
      %1363 = vdwg.mxu0
      %v1364 = vadd.f32 %v1217, %v1317
      %v1365 = vadd.f32 %v1218, %v1320
      %v1366 = vadd.f32 %v1219, %v1323
      %v1367 = vadd.f32 %v1220, %v1326
      %v1368 = vadd.f32 %v1221, %v1329
      %v1369 = vadd.f32 %v1222, %v1332
      %v1370 = vadd.f32 %v1223, %v1335
      %v1371 = vadd.f32 %v1224, %v1338
      %v1372 = vadd.f32 %v1225, %v1341
      %v1373 = vadd.f32 %v1226, %v1344
      %v1374 = vadd.f32 %v1227, %v1347
      %v1375 = vadd.f32 %v1228, %v1350
      %v1376 = vadd.f32 %v1229, %v1353
      %v1377 = vadd.f32 %v1230, %v1356
      %v1378 = vadd.f32 %v1231, %v1359
      %v1379 = vadd.f32 %v1232, %v1362
      %v1380 = vld [vmem:[%s1085 + $0x2] sm:$0xff]
      %v1381 = vld [vmem:[%s1085 + $0x12] sm:$0xff]
      %v1382 = vld [vmem:[%s1085 + $0x22] sm:$0xff]
      %v1383 = vld [vmem:[%s1085 + $0x32] sm:$0xff]
      %v1384 = vld [vmem:[%s1085 + $0x42] sm:$0xff]
      %v1385 = vld [vmem:[%s1085 + $0x52] sm:$0xff]
      %v1386 = vld [vmem:[%s1085 + $0x62] sm:$0xff]
      %v1387 = vld [vmem:[%s1085 + $0x72] sm:$0xff]
      %v1388 = vld [vmem:[%s1085 + $0xa2] sm:$0xff]
      %v1389 = vld [vmem:[%s1085 + $0xb2] sm:$0xff]
      %v1390 = vld [vmem:[%s1085 + $0xc2] sm:$0xff]
      %v1391 = vld [vmem:[%s1085 + $0xd2] sm:$0xff]
      %v1392 = vld [vmem:[%s1085 + $0xe2] sm:$0xff]
      %v1393 = vld [vmem:[%s1085 + $0xf2] sm:$0xff]
      %v1394 = vld [vmem:[%s1085 + $0x102] sm:$0xff]
      %v1395 = vld [vmem:[%s1085 + $0x112] sm:$0xff]
      %v1396 = vld [vmem:[%s1 + $0x80] sm:$0xff]
      %v1397 = vld [vmem:[%s1 + $0x88] sm:$0xff]
      %v1399 = vsel %vm269, %v1380, 0
      %v1402 = vsel %vm269, %v1381, 0
      %v1405 = vsel %vm269, %v1382, 0
      %v1408 = vsel %vm269, %v1383, 0
      %v1411 = vsel %vm269, %v1384, 0
      %v1414 = vsel %vm269, %v1385, 0
      %v1417 = vsel %vm269, %v1386, 0
      %v1420 = vsel %vm269, %v1387, 0
      %v1423 = vsel %vm269, %v1388, 0
      %v1426 = vsel %vm269, %v1389, 0
      %v1429 = vsel %vm269, %v1390, 0
      %v1432 = vsel %vm269, %v1391, 0
      %v1435 = vsel %vm269, %v1392, 0
      %v1438 = vsel %vm269, %v1393, 0
      %v1441 = vsel %vm269, %v1394, 0
      %v1444 = vsel %vm269, %v1395, 0
      %1446 = vmatpush.msra.mxu0 0.0
      %1447 = vmatpush.msra.mxu0 0.0
      %1448 = vmatpush.msra.mxu0 0.0
      %1449 = vmatpush.msra.mxu0 0.0
      %1450 = vmatpush.msra.mxu0 0.0
      %1451 = vmatpush.msra.mxu0 0.0
      %1452 = vmatpush.msra.mxu0 0.0
      %1453 = vmatpush.msra.mxu0 0.0
      %1454 = vmatpush.msra.mxu0 0.0
      %1455 = vmatpush.msra.mxu0 0.0
      %1456 = vmatpush.msra.mxu0 0.0
      %1457 = vmatpush.msra.mxu0 0.0
      %1458 = vmatpush.msra.mxu0 0.0
      %1459 = vmatpush.msra.mxu0 0.0
      %1460 = vmatpush.msra.mxu0 %v1397
      %1461 = vmatpush.msra.mxu0 %v1396
      %1462 = vmatmul.f32.gmra.mxu0 %v1399
      %v1463 = vpop.f32.mrf.mxu0
      %v1464 = vadd.f32 0.0, %v1463
      %1465 = vmatmul.f32.gmra.mxu0 %v1402
      %v1466 = vpop.f32.mrf.mxu0
      %v1467 = vadd.f32 0.0, %v1466
      %1468 = vmatmul.f32.gmra.mxu0 %v1405
      %v1469 = vpop.f32.mrf.mxu0
      %v1470 = vadd.f32 0.0, %v1469
      %1471 = vmatmul.f32.gmra.mxu0 %v1408
      %v1472 = vpop.f32.mrf.mxu0
      %v1473 = vadd.f32 0.0, %v1472
      %1474 = vmatmul.f32.gmra.mxu0 %v1411
      %v1475 = vpop.f32.mrf.mxu0
      %v1476 = vadd.f32 0.0, %v1475
      %1477 = vmatmul.f32.gmra.mxu0 %v1414
      %v1478 = vpop.f32.mrf.mxu0
      %v1479 = vadd.f32 0.0, %v1478
      %1480 = vmatmul.f32.gmra.mxu0 %v1417
      %v1481 = vpop.f32.mrf.mxu0
      %v1482 = vadd.f32 0.0, %v1481
      %1483 = vmatmul.f32.gmra.mxu0 %v1420
      %v1484 = vpop.f32.mrf.mxu0
      %v1485 = vadd.f32 0.0, %v1484
      %1486 = vmatmul.f32.gmra.mxu0 %v1423
      %v1487 = vpop.f32.mrf.mxu0
      %v1488 = vadd.f32 0.0, %v1487
      %1489 = vmatmul.f32.gmra.mxu0 %v1426
      %v1490 = vpop.f32.mrf.mxu0
      %v1491 = vadd.f32 0.0, %v1490
      %1492 = vmatmul.f32.gmra.mxu0 %v1429
      %v1493 = vpop.f32.mrf.mxu0
      %v1494 = vadd.f32 0.0, %v1493
      %1495 = vmatmul.f32.gmra.mxu0 %v1432
      %v1496 = vpop.f32.mrf.mxu0
      %v1497 = vadd.f32 0.0, %v1496
      %1498 = vmatmul.f32.gmra.mxu0 %v1435
      %v1499 = vpop.f32.mrf.mxu0
      %v1500 = vadd.f32 0.0, %v1499
      %1501 = vmatmul.f32.gmra.mxu0 %v1438
      %v1502 = vpop.f32.mrf.mxu0
      %v1503 = vadd.f32 0.0, %v1502
      %1504 = vmatmul.f32.gmra.mxu0 %v1441
      %v1505 = vpop.f32.mrf.mxu0
      %v1506 = vadd.f32 0.0, %v1505
      %1507 = vmatmul.f32.gmra.mxu0 %v1444
      %v1508 = vpop.f32.mrf.mxu0
      %v1509 = vadd.f32 0.0, %v1508
      %1510 = vdwg.mxu0
      %v1511 = vadd.f32 %v1364, %v1464
      %v1512 = vadd.f32 %v1365, %v1467
      %v1513 = vadd.f32 %v1366, %v1470
      %v1514 = vadd.f32 %v1367, %v1473
      %v1515 = vadd.f32 %v1368, %v1476
      %v1516 = vadd.f32 %v1369, %v1479
      %v1517 = vadd.f32 %v1370, %v1482
      %v1518 = vadd.f32 %v1371, %v1485
      %v1519 = vadd.f32 %v1372, %v1488
      %v1520 = vadd.f32 %v1373, %v1491
      %v1521 = vadd.f32 %v1374, %v1494
      %v1522 = vadd.f32 %v1375, %v1497
      %v1523 = vadd.f32 %v1376, %v1500
      %v1524 = vadd.f32 %v1377, %v1503
      %v1525 = vadd.f32 %v1378, %v1506
      %v1526 = vadd.f32 %v1379, %v1509
      %v1527 = vld [vmem:[%s2] sm:$0x1]
      %v1529 = vperm.slane %v1527, 0
      %v1531 = vadd.f32 %v1511, %v1529
      %v1532 = vadd.f32 %v1512, %v1529
      %v1533 = vadd.f32 %v1513, %v1529
      %v1534 = vadd.f32 %v1514, %v1529
      %v1535 = vadd.f32 %v1515, %v1529
      %v1536 = vadd.f32 %v1516, %v1529
      %v1537 = vadd.f32 %v1517, %v1529
      %v1538 = vadd.f32 %v1518, %v1529
      %v1539 = vadd.f32 %v1519, %v1529
      %v1540 = vadd.f32 %v1520, %v1529
      %v1541 = vadd.f32 %v1521, %v1529
      %v1542 = vadd.f32 %v1522, %v1529
      %v1543 = vadd.f32 %v1523, %v1529
      %v1544 = vadd.f32 %v1524, %v1529
      %v1545 = vadd.f32 %v1525, %v1529
      %v1546 = vadd.f32 %v1526, %v1529
      %v1547 = vmax.f32 %v1531, 0.0
      %v1548 = vmax.f32 %v1532, 0.0
      %v1549 = vmax.f32 %v1533, 0.0
      %v1550 = vmax.f32 %v1534, 0.0
      %v1551 = vmax.f32 %v1535, 0.0
      %v1552 = vmax.f32 %v1536, 0.0
      %v1553 = vmax.f32 %v1537, 0.0
      %v1554 = vmax.f32 %v1538, 0.0
      %v1555 = vmax.f32 %v1539, 0.0
      %v1556 = vmax.f32 %v1540, 0.0
      %v1557 = vmax.f32 %v1541, 0.0
      %v1558 = vmax.f32 %v1542, 0.0
      %v1559 = vmax.f32 %v1543, 0.0
      %v1560 = vmax.f32 %v1544, 0.0
      %v1561 = vmax.f32 %v1545, 0.0
      %v1562 = vmax.f32 %v1546, 0.0
      %v1563 = vld [vmem:[%s3] sm:$0xff]
      %v1564 = vld [vmem:[%s3 + $0x8] sm:$0xff]
      %v1565 = vld [vmem:[%s3 + $0x10] sm:$0xff]
      %v1566 = vld [vmem:[%s3 + $0x18] sm:$0xff]
      %v1567 = vld [vmem:[%s3 + $0x20] sm:$0xff]
      %v1568 = vld [vmem:[%s3 + $0x28] sm:$0xff]
      %v1569 = vld [vmem:[%s4] sm:$0x1]
      %v1571 = vperm.slane %v1569, 0
      %vm1573 = vcmask 392192
      %v1575 = vsel %vm1573, %v1547, 0
      %v1578 = vsel %vm1573, %v1548, 0
      %v1581 = vsel %vm1573, %v1549, 0
      %v1584 = vsel %vm1573, %v1550, 0
      %v1587 = vsel %vm1573, %v1551, 0
      %v1590 = vsel %vm1573, %v1552, 0
      %v1593 = vsel %vm1573, %v1553, 0
      %v1596 = vsel %vm1573, %v1554, 0
      %v1599 = vsel %vm1573, %v1555, 0
      %v1602 = vsel %vm1573, %v1556, 0
      %v1605 = vsel %vm1573, %v1557, 0
      %v1608 = vsel %vm1573, %v1558, 0
      %v1611 = vsel %vm1573, %v1559, 0
      %v1614 = vsel %vm1573, %v1560, 0
      %v1617 = vsel %vm1573, %v1561, 0
      %v1620 = vsel %vm1573, %v1562, 0
      %1622 = vmatpush.msra.mxu0 0.0
      %1623 = vmatpush.msra.mxu0 0.0
      %1624 = vmatpush.msra.mxu0 0.0
      %1625 = vmatpush.msra.mxu0 0.0
      %1626 = vmatpush.msra.mxu0 0.0
      %1627 = vmatpush.msra.mxu0 0.0
      %1628 = vmatpush.msra.mxu0 0.0
      %1629 = vmatpush.msra.mxu0 0.0
      %1630 = vmatpush.msra.mxu0 0.0
      %1631 = vmatpush.msra.mxu0 0.0
      %1632 = vmatpush.msra.mxu0 %v1568
      %1633 = vmatpush.msra.mxu0 %v1567
      %1634 = vmatpush.msra.mxu0 %v1566
      %1635 = vmatpush.msra.mxu0 %v1565
      %1636 = vmatpush.msra.mxu0 %v1564
      %1637 = vmatpush.msra.mxu0 %v1563
      %1638 = vmatmul.f32.gmra.mxu0 %v1575
      %v1639 = vpop.f32.mrf.mxu0
      %v1640 = vadd.f32 %v1571, %v1639
      %1641 = vmatmul.f32.gmra.mxu0 %v1578
      %v1642 = vpop.f32.mrf.mxu0
      %v1643 = vadd.f32 %v1571, %v1642
      %1644 = vmatmul.f32.gmra.mxu0 %v1581
      %v1645 = vpop.f32.mrf.mxu0
      %v1646 = vadd.f32 %v1571, %v1645
      %1647 = vmatmul.f32.gmra.mxu0 %v1584
      %v1648 = vpop.f32.mrf.mxu0
      %v1649 = vadd.f32 %v1571, %v1648
      %1650 = vmatmul.f32.gmra.mxu0 %v1587
      %v1651 = vpop.f32.mrf.mxu0
      %v1652 = vadd.f32 %v1571, %v1651
      %1653 = vmatmul.f32.gmra.mxu0 %v1590
      %v1654 = vpop.f32.mrf.mxu0
      %v1655 = vadd.f32 %v1571, %v1654
      %1656 = vmatmul.f32.gmra.mxu0 %v1593
      %v1657 = vpop.f32.mrf.mxu0
      %v1658 = vadd.f32 %v1571, %v1657
      %1659 = vmatmul.f32.gmra.mxu0 %v1596
      %v1660 = vpop.f32.mrf.mxu0
      %v1661 = vadd.f32 %v1571, %v1660
      %1662 = vmatmul.f32.gmra.mxu0 %v1599
      %v1663 = vpop.f32.mrf.mxu0
      %v1664 = vadd.f32 %v1571, %v1663
      %1665 = vmatmul.f32.gmra.mxu0 %v1602
      %v1666 = vpop.f32.mrf.mxu0
      %v1667 = vadd.f32 %v1571, %v1666
      %1668 = vmatmul.f32.gmra.mxu0 %v1605
      %v1669 = vpop.f32.mrf.mxu0
      %v1670 = vadd.f32 %v1571, %v1669
      %1671 = vmatmul.f32.gmra.mxu0 %v1608
      %v1672 = vpop.f32.mrf.mxu0
      %v1673 = vadd.f32 %v1571, %v1672
      %1674 = vmatmul.f32.gmra.mxu0 %v1611
      %v1675 = vpop.f32.mrf.mxu0
      %v1676 = vadd.f32 %v1571, %v1675
      %1677 = vmatmul.f32.gmra.mxu0 %v1614
      %v1678 = vpop.f32.mrf.mxu0
      %v1679 = vadd.f32 %v1571, %v1678
      %1680 = vmatmul.f32.gmra.mxu0 %v1617
      %v1681 = vpop.f32.mrf.mxu0
      %v1682 = vadd.f32 %v1571, %v1681
      %1683 = vmatmul.f32.gmra.mxu0 %v1620
      %v1684 = vpop.f32.mrf.mxu0
      %v1685 = vadd.f32 %v1571, %v1684
      %1686 = vdwg.mxu0
      %vm1687 = vcmask 64512
      %1688 = vst.msk [vmem:[%s231] sm:$0xff] %vm1687, %v1640
      %1689 = vst.msk [vmem:[%s231 + $0x8] sm:$0xff] %vm1687, %v1643
      %1690 = vst.msk [vmem:[%s231 + $0x10] sm:$0xff] %vm1687, %v1646
      %1691 = vst.msk [vmem:[%s231 + $0x18] sm:$0xff] %vm1687, %v1649
      %1692 = vst.msk [vmem:[%s231 + $0x20] sm:$0xff] %vm1687, %v1652
      %1693 = vst.msk [vmem:[%s231 + $0x28] sm:$0xff] %vm1687, %v1655
      %1694 = vst.msk [vmem:[%s231 + $0x30] sm:$0xff] %vm1687, %v1658
      %1695 = vst.msk [vmem:[%s231 + $0x38] sm:$0xff] %vm1687, %v1661
      %1696 = vst.msk [vmem:[%s231 + $0x40] sm:$0xff] %vm1687, %v1664
      %1697 = vst.msk [vmem:[%s231 + $0x48] sm:$0xff] %vm1687, %v1667
      %1698 = vst.msk [vmem:[%s231 + $0x50] sm:$0xff] %vm1687, %v1670
      %1699 = vst.msk [vmem:[%s231 + $0x58] sm:$0xff] %vm1687, %v1673
      %1700 = vst.msk [vmem:[%s231 + $0x60] sm:$0xff] %vm1687, %v1676
      %1701 = vst.msk [vmem:[%s231 + $0x68] sm:$0xff] %vm1687, %v1679
      %1702 = vst.msk [vmem:[%s231 + $0x70] sm:$0xff] %vm1687, %v1682
      %1703 = vst.msk [vmem:[%s231 + $0x78] sm:$0xff] %vm1687, %v1685
      %s1704 = smul.u32 2, %s16
      %p1705 = scmp.lt.s32.totalorder %s1704, 3
      %s1706 = scalar_select %p1705, %s1704, 3
      %s1707 = smul.addr %s1706, 8
      %s1708 = smul.addr %s1707, 8
      %s1709 = scalar_lea.vmem %s5, %s1708
      // Predicated region
      $region41: #{tpu_custom_call.1} parent=39 // pred_check
        %p1710 = pneg %p144
      $region42: #{tpu_custom_call.1} parent=39 // pred_check_branch
        %1712 = sbr.rel (%p1710) target = $region44
      $region43: #{tpu_custom_call.1} parent=39 // pred_region
        %s1713 = smul.u32 2, %s16
      $region44: #{tpu_custom_call.1} parent=39 // pred_fallthru
        _
    $region40: #{tpu_custom_call.1} parent=5 // pred_fallthru
      _
    %p1714 = scmp.le.s32.totalorder 2, %s11
    // Predicated region
    $region45: #{tpu_custom_call.1} parent=5 // pred_check
      %p1715 = pneg %p1714
    $region46: #{tpu_custom_call.1} parent=5 // pred_check_branch
      %1717 = sbr.rel (%p1715) target = $region48
    $region47: #{tpu_custom_call.1} parent=5 // pred_region
      %s1718 = ssub.s32 %s11, 2
      // Predicated region
      $region49: #{tpu_custom_call.1} parent=47 // pred_check
        %p1719 = pneg %p150
      $region50: #{tpu_custom_call.1} parent=47 // pred_check_branch
        %1721 = sbr.rel (%p1719) target = $region52
      $region51: #{tpu_custom_call.1} parent=47 // pred_region
        %s1722 = smul.u32 2, %s17
        %p1723 = scmp.lt.s32.totalorder %s1722, 3
        %s1724 = scalar_select %p1723, %s1722, 3
        %s1725 = smul.addr %s1724, 8
        %s1726 = smul.addr %s1725, 8
        %s1727 = scalar_lea.vmem %s5, %s1726
      $region52: #{tpu_custom_call.1} parent=47 // pred_fallthru
        _
    $region48: #{tpu_custom_call.1} parent=5 // pred_fallthru
      _
  $region6: #{tpu_custom_call.1} parent=0 // loop_footer
    %s15 = sadd.s32 1, %s11
  $region7: #{tpu_custom_call.1} parent=0 // loop_footer_branch
    %10 = sbr.rel target = $region3
  $region8: #{tpu_custom_call.1} parent=0 // loop_exit
    _

</llo_original>
